<compile_context>
chip_gen: v5e
topology: v5e:2x2
jax: 0.10.0
libtpu: 0.0.40
codegen_flags: <defaults>
</compile_context>

<pallas_src>
import functools
import math

import jax
import jax.numpy as jnp
from jax import lax
from jax.experimental import pallas as pl
from jax.experimental.pallas import tpu as pltpu


# ----------------------------------------------------------------------------
# Generation-aware knobs (VMEM limit + row-tile target)
# ----------------------------------------------------------------------------
def _vmem_limit_bytes():
    try:
        cap = int(pltpu.get_tpu_info().vmem_capacity_bytes)
    except Exception:                       # emulator / API drift: be conservative
        cap = 64 * 1024 * 1024
    return max(32 * 1024 * 1024, min((cap * 3) // 4, 100 * 1024 * 1024))


_VMEM_LIMIT = _vmem_limit_bytes()
# 512-row tiles on 128-MiB-VMEM parts (v5e/v6e); 256 on v7x (64 MiB VMEM).
_ROW_TARGET = 512 if _VMEM_LIMIT >= 72 * 1024 * 1024 else 256
_ACT_DTYPE = jnp.bfloat16                   # MXU-native activation/weight dtype


def _cparams(num_parallel_axes):
    return pltpu.CompilerParams(
        dimension_semantics=("parallel",) * num_parallel_axes,
        vmem_limit_bytes=_VMEM_LIMIT)


def _row_block(m, target):
    """Row-tile size: full extent when small, 8-aligned tile otherwise."""
    if m <= target:
        return m          # single full-extent block (always layout-legal)
    return target         # multiple of 8; pl.cdiv grid masks the tail block


# ----------------------------------------------------------------------------
# Fused (LN ->) linear (-> activation) (-> residual) kernel
# ----------------------------------------------------------------------------
def _make_fused_linear_kernel(*, has_ln, activation, has_residual, eps=1e-5):
    def kernel(*refs):
        i = 0
        x_ref = refs[i]; i += 1
        if has_ln:
            g_ref, bln_ref = refs[i], refs[i + 1]; i += 2
        w_ref, bias_ref = refs[i], refs[i + 1]; i += 2
        if has_residual:
            res_ref = refs[i]; i += 1
        o_ref = refs[i]

        x = x_ref[...]
        if has_ln:
            xf = x.astype(jnp.float32)
            mu = jnp.mean(xf, axis=-1, keepdims=True)
            var = jnp.mean(jnp.square(xf - mu), axis=-1, keepdims=True)
            xf = (xf - mu) * lax.rsqrt(var + eps)
            xf = (xf * g_ref[...].astype(jnp.float32)
                  + bln_ref[...].astype(jnp.float32))
            xm = xf.astype(w_ref.dtype)
        else:
            xm = x.astype(w_ref.dtype)

        # bf16 x bf16 -> f32 accumulate on the MXU.
        y = jnp.dot(xm, w_ref[...], preferred_element_type=jnp.float32)
        y = y + bias_ref[...].astype(jnp.float32)

        if activation == "gelu":
            # TODO(synk): PyTorch nn.GELU defaults to the erf form; tanh-approx
            # (EUP-friendly) is used since EncoderBlock source was unspecified.
            y = jax.nn.gelu(y, approximate=True)
        elif activation == "softmax":
            y = y - jnp.max(y, axis=-1, keepdims=True)
            e = jnp.exp(y)
            y = e / jnp.sum(e, axis=-1, keepdims=True)

        if has_residual:
            y = y + res_ref[...].astype(jnp.float32)

        o_ref[...] = y.astype(o_ref.dtype)

    return kernel


def fused_linear(x, w, b, *, ln=None, activation=None, residual=None,
                 out_dtype=None, block_rows=None):
    """x: (M, K), w: (K, N), b: (N,) [, ln=(gamma, beta) (K,), residual (M, N)]."""
    M, K = x.shape
    N = w.shape[1]
    out_dtype = out_dtype or x.dtype
    bm = _row_block(M, block_rows or _ROW_TARGET)
    grid = (pl.cdiv(M, bm),)

    args = [x]
    in_specs = [pl.BlockSpec((bm, K), lambda i: (i, 0))]
    if ln is not None:
        gamma, beta = ln
        args += [gamma.reshape(1, K), beta.reshape(1, K)]
        in_specs += [pl.BlockSpec((1, K), lambda i: (0, 0)),
                     pl.BlockSpec((1, K), lambda i: (0, 0))]
    args += [w, b.reshape(1, N)]
    in_specs += [pl.BlockSpec((K, N), lambda i: (0, 0)),   # weight VMEM-resident
                 pl.BlockSpec((1, N), lambda i: (0, 0))]
    if residual is not None:
        args.append(residual)
        in_specs.append(pl.BlockSpec((bm, N), lambda i: (i, 0)))

    kernel = _make_fused_linear_kernel(
        has_ln=ln is not None, activation=activation,
        has_residual=residual is not None)

    isz_x = jnp.dtype(x.dtype).itemsize
    isz_w = jnp.dtype(w.dtype).itemsize
    bytes_accessed = (M * K * isz_x + K * N * isz_w + N * 4
                      + M * N * jnp.dtype(out_dtype).itemsize
                      + (M * N * isz_x if residual is not None else 0)
                      + (2 * K * 4 if ln is not None else 0))
    cost = pl.CostEstimate(
        flops=2 * M * K * N,
        transcendentals=(M * N if activation in ("gelu", "softmax") else 0),
        bytes_accessed=bytes_accessed)

    return pl.pallas_call(
        kernel,
        out_shape=jax.ShapeDtypeStruct((M, N), out_dtype),
        grid=grid,
        in_specs=in_specs,
        out_specs=pl.BlockSpec((bm, N), lambda i: (i, 0)),
        compiler_params=_cparams(1),
        cost_estimate=cost,
    )(*args)


# ----------------------------------------------------------------------------
# Patch embedding: linear projection + positional add + CLS row, fused
# ----------------------------------------------------------------------------
def _patch_embed_kernel(p_ref, w_ref, b_ref, posr_ref, cls0_ref, o_ref):
    n_p = p_ref.shape[1]
    y = jnp.dot(p_ref[0].astype(w_ref.dtype), w_ref[...],
                preferred_element_type=jnp.float32)
    y = y + b_ref[...].astype(jnp.float32) + posr_ref[...].astype(jnp.float32)
    # Patch tokens occupy rows [0, n_p) (aligned store); CLS token (already
    # including its positional embedding) is written to the last row.
    o_ref[0, pl.ds(0, n_p), :] = y.astype(o_ref.dtype)
    o_ref[0, pl.ds(n_p, 1), :] = cls0_ref[...].astype(o_ref.dtype)


def patch_embed(patches, w, b, pos_rest, cls0, out_dtype):
    """patches: (B, Np, Pd) bf16, w: (Pd, D) bf16, b: (D,), pos_rest: (Np, D),
    cls0: (1, D) == cls_token + pos[0]. Returns (B, Np + 1, D)."""
    B, Np, Pd = patches.shape
    D = w.shape[1]
    S = Np + 1
    cost = pl.CostEstimate(
        flops=2 * B * Np * Pd * D, transcendentals=0,
        bytes_accessed=(B * Np * Pd * 2 + Pd * D * 2 + D * 4
                        + S * D * 4 + B * S * D * 2))
    return pl.pallas_call(
        _patch_embed_kernel,
        out_shape=jax.ShapeDtypeStruct((B, S, D), out_dtype),
        grid=(B,),
        in_specs=[
            pl.BlockSpec((1, Np, Pd), lambda i: (i, 0, 0)),
            pl.BlockSpec((Pd, D), lambda i: (0, 0)),
            pl.BlockSpec((1, D), lambda i: (0, 0)),
            pl.BlockSpec((Np, D), lambda i: (0, 0)),
            pl.BlockSpec((1, D), lambda i: (0, 0)),
        ],
        out_specs=pl.BlockSpec((1, S, D), lambda i: (i, 0, 0)),
        compiler_params=_cparams(1),
        cost_estimate=cost,
    )(patches, w, b.reshape(1, D), pos_rest, cls0)


# ----------------------------------------------------------------------------
# Multi-head attention + output projection + residual, fused.
# QKV is consumed in (B, S, 3*dim) layout (no wrapper transposes); per head h:
#   out += softmax(q_h k_h^T / sqrt(hd)) v_h @ Wo[h*hd:(h+1)*hd, :]
# which equals concat_h(o_h) @ Wo.  The only store is a lane-dense (1,S,dim).
# ----------------------------------------------------------------------------
def _attention_kernel(qkv_ref, wo_ref, bo_ref, res_ref, o_ref, *,
                      num_heads, head_dim, scale):
    dim = num_heads * head_dim
    acc = bo_ref[...].astype(jnp.float32) + res_ref[0].astype(jnp.float32)
    for h in range(num_heads):                     # static unroll over heads
        lo = h * head_dim
        q = qkv_ref[0, :, lo:lo + head_dim]                      # (S, hd) bf16
        k = qkv_ref[0, :, dim + lo:dim + lo + head_dim]          # (S, hd)
        v = qkv_ref[0, :, 2 * dim + lo:2 * dim + lo + head_dim]  # (S, hd)
        s = lax.dot_general(q, k, (((1,), (1,)), ((), ())),
                            preferred_element_type=jnp.float32) * scale
        s = s - jnp.max(s, axis=-1, keepdims=True)
        p = jnp.exp(s)
        p = p * pl.reciprocal(jnp.sum(p, axis=-1, keepdims=True), approx=True)
        o_h = jnp.dot(p.astype(v.dtype), v,
                      preferred_element_type=jnp.float32)         # (S, hd) f32
        w_h = wo_ref[lo:lo + head_dim, :]                         # (hd, dim)
        acc = acc + jnp.dot(o_h.astype(w_h.dtype), w_h,
                            preferred_element_type=jnp.float32)
    o_ref[0] = acc.astype(o_ref.dtype)


def attention_block(qkv, wo, bo, residual, num_heads, head_dim):
    """qkv: (B, S, 3*dim), wo: (dim, dim), bo: (dim,), residual: (B, S, dim)."""
    B, S, three_dim = qkv.shape
    dim = num_heads * head_dim
    kernel = functools.partial(_attention_kernel, num_heads=num_heads,
                               head_dim=head_dim,
                               scale=1.0 / math.sqrt(head_dim))
    isz = jnp.dtype(qkv.dtype).itemsize
    cost = pl.CostEstimate(
        flops=B * (4 * num_heads * S * S * head_dim + 2 * S * dim * dim),
        transcendentals=B * num_heads * S * S,
        bytes_accessed=(B * S * three_dim * isz + dim * dim * isz + dim * 4
                        + 2 * B * S * dim * isz))
    return pl.pallas_call(
        kernel,
        out_shape=jax.ShapeDtypeStruct((B, S, dim), qkv.dtype),
        grid=(B,),
        in_specs=[
            pl.BlockSpec((1, S, three_dim), lambda i: (i, 0, 0)),
            pl.BlockSpec((dim, dim), lambda i: (0, 0)),      # Wo VMEM-resident
            pl.BlockSpec((1, dim), lambda i: (0, 0)),
            pl.BlockSpec((1, S, dim), lambda i: (i, 0, 0)),
        ],
        out_specs=pl.BlockSpec((1, S, dim), lambda i: (i, 0, 0)),
        compiler_params=_cparams(1),
        cost_estimate=cost,
    )(qkv, wo, bo.reshape(1, dim), residual)


# ----------------------------------------------------------------------------
# Model glue (pure JAX: patch extraction layout, parameter setup)
# ----------------------------------------------------------------------------
def extract_patches(images, patch_size):
    """NCHW -> (B, num_patches, C*p*p), row-major patch order."""
    B, C, H, W = images.shape
    p = patch_size
    gh, gw = H // p, W // p
    x = images.reshape(B, C, gh, p, gw, p)
    x = x.transpose(0, 2, 4, 1, 3, 5)  # (B, gh, gw, C, p, p)
    return x.reshape(B, gh * gw, C * p * p)


def _init_linear(key, d_in, d_out, w_dtype=_ACT_DTYPE):
    k1, k2 = jax.random.split(key)
    scale = 1.0 / math.sqrt(d_in)
    w = jax.random.uniform(k1, (d_in, d_out), jnp.float32, -scale, scale)
    b = jax.random.uniform(k2, (d_out,), jnp.float32, -scale, scale)
    return w.astype(w_dtype), b          # weights bf16, biases f32


def init_vit_params(key, image_size, patch_size, dim, num_classes, depth,
                    num_heads):
    num_patches = (image_size // patch_size) ** 2
    patch_dim = 3 * patch_size ** 2
    keys = jax.random.split(key, 4 + depth)
    params = {}
    params["patch_w"], params["patch_b"] = _init_linear(keys[0], patch_dim, dim)
    params["pos_emb"] = jax.random.normal(keys[1], (1, num_patches + 1, dim),
                                          jnp.float32)
    params["cls"] = jax.random.normal(keys[2], (1, 1, dim), jnp.float32)
    params["head_w"], params["head_b"] = _init_linear(keys[3], dim, num_classes)
    blocks = []
    for d in range(depth):
        bk = jax.random.split(keys[4 + d], 6)
        wq, bq = _init_linear(bk[0], dim, dim)
        wk, bk_ = _init_linear(bk[1], dim, dim)
        wv, bv = _init_linear(bk[2], dim, dim)
        blk = {
            "ln1_g": jnp.ones((dim,), jnp.float32),
            "ln1_b": jnp.zeros((dim,), jnp.float32),
            "ln2_g": jnp.ones((dim,), jnp.float32),
            "ln2_b": jnp.zeros((dim,), jnp.float32),
            # Fused QKV weight: (dim, 3*dim), columns [q | k | v].
            "w_qkv": jnp.concatenate([wq, wk, wv], axis=1),
            "b_qkv": jnp.concatenate([bq, bk_, bv], axis=0),
        }
        blk["wo"], blk["bo"] = _init_linear(bk[3], dim, dim)
        blk["w1"], blk["b1"] = _init_linear(bk[4], dim, 4 * dim)
        blk["w2"], blk["b2"] = _init_linear(bk[5], 4 * dim, dim)
        blocks.append(blk)
    params["blocks"] = blocks
    return params


def vit_forward(params, images, patch_size, num_heads):
    B = images.shape[0]
    dim = params["patch_w"].shape[1]
    hd = dim // num_heads

    patches = extract_patches(images, patch_size).astype(_ACT_DTYPE)  # (B,Np,Pd)
    pos = params["pos_emb"]                                           # (1,S,dim)
    cls0 = params["cls"][0] + pos[0, :1]                              # (1, dim)

    # Patch projection + positional add + CLS row, all inside one kernel.
    # Token order: [patch_0 .. patch_{Np-1}, CLS]; attention / LN / MLP are
    # permutation-equivariant so the class-head result matches the reference.
    x = patch_embed(patches, params["patch_w"], params["patch_b"],
                    pos[0, 1:], cls0, _ACT_DTYPE)                     # (B,S,dim)
    S = x.shape[1]
    M = B * S
    x2 = x.reshape(M, dim)

    for blk in params["blocks"]:
        # --- attention sub-block: LN1+QKV fused; MHA+out-proj+residual fused.
        qkv = fused_linear(x2, blk["w_qkv"], blk["b_qkv"],
                           ln=(blk["ln1_g"], blk["ln1_b"]))           # (M,3*dim)
        x = attention_block(qkv.reshape(B, S, 3 * dim), blk["wo"], blk["bo"],
                            x2.reshape(B, S, dim), num_heads, hd)     # (B,S,dim)
        x2 = x.reshape(M, dim)

        # --- MLP sub-block: LN2 + W1 + GELU fused; W2 + residual fused.
        h = fused_linear(x2, blk["w1"], blk["b1"],
                         ln=(blk["ln2_g"], blk["ln2_b"]), activation="gelu")
        x2 = fused_linear(h, blk["w2"], blk["b2"], residual=x2)

    x = x2.reshape(B, S, dim)
    cls_tok = x[:, S - 1]                                             # (B, dim)
    # Class head with final softmax fused in-kernel (matches nn.Softmax(dim=1)).
    return fused_linear(cls_tok, params["head_w"], params["head_b"],
                        activation="softmax", out_dtype=jnp.float32)  # (B, C)


# ----------------------------------------------------------------------------
# Main
# ----------------------------------------------------------------------------
if __name__ == "__main__":
    # Small, module-consistent shapes.
    image_size = 16
    patch_size = 4
    dim = 32
    num_classes = 10
    depth = 2
    num_heads = 4
    batch = 2

    key = jax.random.PRNGKey(0)
    k_params, k_img = jax.random.split(key)

    params = init_vit_params(k_params, image_size, patch_size, dim,
                             num_classes, depth, num_heads)
    images = jax.random.normal(k_img, (batch, 3, image_size, image_size),
                               jnp.float32)

    fwd = jax.jit(functools.partial(vit_forward, patch_size=patch_size,
                                    num_heads=num_heads))
    probs = jax.block_until_ready(fwd(params, images))

    assert probs.shape == (batch, num_classes)
    assert bool(jnp.all(jnp.isfinite(probs)))
    # Rows should sum to ~1 after the (f32, exact) softmax head.
    assert bool(jnp.allclose(jnp.sum(probs, axis=1), 1.0, atol=1e-4))
    print("KERNEL_OK")
</pallas_src>

<mosaic_0001>
module attributes {stable_mosaic.version = 11 : i64} {
  func.func @_patch_embed_kernel(%arg0: i32, %arg1: memref<1x16x48xbf16, #tpu.memory_space<vmem>>, %arg2: memref<48x32xbf16, #tpu.memory_space<vmem>>, %arg3: memref<1x32xf32, #tpu.memory_space<vmem>>, %arg4: memref<16x32xf32, #tpu.memory_space<vmem>>, %arg5: memref<1x32xf32, #tpu.memory_space<vmem>>, %arg6: memref<1x17x32xbf16, #tpu.memory_space<vmem>>) attributes {dimension_semantics = [#tpu.dimension_semantics<parallel>], iteration_bounds = array<i64: 2>, scalar_prefetch = 0 : i64, scratch_operands = 0 : i64, tpu.core_type = #tpu.core_type<tc>, window_params = [{transform_indices = @transform_0, window_bounds = array<i64: 1, 16, 48>}, {pipeline_mode = #tpu.pipeline_mode<synchronous>, transform_indices = @transform_1, window_bounds = array<i64: 48, 32>}, {pipeline_mode = #tpu.pipeline_mode<synchronous>, transform_indices = @transform_2, window_bounds = array<i64: 1, 32>}, {pipeline_mode = #tpu.pipeline_mode<synchronous>, transform_indices = @transform_3, window_bounds = array<i64: 16, 32>}, {pipeline_mode = #tpu.pipeline_mode<synchronous>, transform_indices = @transform_4, window_bounds = array<i64: 1, 32>}, {transform_indices = @transform_5, window_bounds = array<i64: 1, 17, 32>}]} {
    %c0 = arith.constant 0 : index
    %c0_0 = arith.constant 0 : index
    %c0_1 = arith.constant 0 : index
    %0 = vector.load %arg1[%c0, %c0_0, %c0_1] : memref<1x16x48xbf16, #tpu.memory_space<vmem>>, vector<1x16x48xbf16>
    %1 = vector.shape_cast %0 : vector<1x16x48xbf16> to vector<16x48xbf16>
    %c0_2 = arith.constant 0 : index
    %c0_3 = arith.constant 0 : index
    %2 = vector.load %arg2[%c0_2, %c0_3] : memref<48x32xbf16, #tpu.memory_space<vmem>>, vector<48x32xbf16>
    %cst = arith.constant dense<0.000000e+00> : vector<16x32xf32>
    %3 = tpu.matmul %1, %2, %cst {dimension_numbers = #tpu.dot_dimension_numbers<[1], [0], [0], [1], [0, 0, 1, 1], [], []>} : vector<16x48xbf16>, vector<48x32xbf16>, vector<16x32xf32> -> vector<16x32xf32>
    %c0_4 = arith.constant 0 : index
    %c0_5 = arith.constant 0 : index
    %4 = vector.load %arg3[%c0_4, %c0_5] : memref<1x32xf32, #tpu.memory_space<vmem>>, vector<1x32xf32>
    %5 = vector.broadcast %4 : vector<1x32xf32> to vector<16x32xf32>
    %6 = arith.addf %3, %5 : vector<16x32xf32>
    %c0_6 = arith.constant 0 : index
    %c0_7 = arith.constant 0 : index
    %7 = vector.load %arg4[%c0_6, %c0_7] : memref<16x32xf32, #tpu.memory_space<vmem>>, vector<16x32xf32>
    %8 = arith.addf %6, %7 : vector<16x32xf32>
    %9 = arith.truncf %8 : vector<16x32xf32> to vector<16x32xbf16>
    %c0_8 = arith.constant 0 : index
    %c0_9 = arith.constant 0 : index
    %c0_10 = arith.constant 0 : index
    %10 = vector.load %arg6[%c0_8, %c0_9, %c0_10] : memref<1x17x32xbf16, #tpu.memory_space<vmem>>, vector<1x16x32xbf16>
    %11 = vector.shape_cast %10 : vector<1x16x32xbf16> to vector<16x32xbf16>
    %12 = vector.shape_cast %9 : vector<16x32xbf16> to vector<1x16x32xbf16>
    tpu.vector_store %arg6[%c0_8, %c0_9, %c0_10], %12 {strides = array<i32>} : memref<1x17x32xbf16, #tpu.memory_space<vmem>>, vector<1x16x32xbf16>,
    %c0_11 = arith.constant 0 : index
    %c0_12 = arith.constant 0 : index
    %13 = vector.load %arg5[%c0_11, %c0_12] : memref<1x32xf32, #tpu.memory_space<vmem>>, vector<1x32xf32>
    %14 = arith.truncf %13 : vector<1x32xf32> to vector<1x32xbf16>
    %c0_13 = arith.constant 0 : index
    %c16 = arith.constant 16 : index
    %c0_14 = arith.constant 0 : index
    %15 = vector.load %arg6[%c0_13, %c16, %c0_14] : memref<1x17x32xbf16, #tpu.memory_space<vmem>>, vector<1x1x32xbf16>
    %16 = vector.shape_cast %15 : vector<1x1x32xbf16> to vector<1x32xbf16>
    %17 = vector.shape_cast %14 : vector<1x32xbf16> to vector<1x1x32xbf16>
    tpu.vector_store %arg6[%c0_13, %c16, %c0_14], %17 {strides = array<i32>} : memref<1x17x32xbf16, #tpu.memory_space<vmem>>, vector<1x1x32xbf16>,
    return
  }
  func.func @transform_0(%arg0: i32) -> (i32, i32, i32) {
    %c0_i32 = arith.constant 0 : i32
    %c0_i32_0 = arith.constant 0 : i32
    %c0_i32_1 = arith.constant 0 : i32
    return %arg0, %c0_i32, %c0_i32_0 : i32, i32, i32
  }
  func.func @transform_1(%arg0: i32) -> (i32, i32) {
    %c0_i32 = arith.constant 0 : i32
    %c0_i32_0 = arith.constant 0 : i32
    %c0_i32_1 = arith.constant 0 : i32
    return %c0_i32, %c0_i32_0 : i32, i32
  }
  func.func @transform_2(%arg0: i32) -> (i32, i32) {
    %c0_i32 = arith.constant 0 : i32
    %c0_i32_0 = arith.constant 0 : i32
    %c0_i32_1 = arith.constant 0 : i32
    return %c0_i32, %c0_i32_0 : i32, i32
  }
  func.func @transform_3(%arg0: i32) -> (i32, i32) {
    %c0_i32 = arith.constant 0 : i32
    %c0_i32_0 = arith.constant 0 : i32
    %c0_i32_1 = arith.constant 0 : i32
    return %c0_i32, %c0_i32_0 : i32, i32
  }
  func.func @transform_4(%arg0: i32) -> (i32, i32) {
    %c0_i32 = arith.constant 0 : i32
    %c0_i32_0 = arith.constant 0 : i32
    %c0_i32_1 = arith.constant 0 : i32
    return %c0_i32, %c0_i32_0 : i32, i32
  }
  func.func @transform_5(%arg0: i32) -> (i32, i32, i32) {
    %c0_i32 = arith.constant 0 : i32
    %c0_i32_0 = arith.constant 0 : i32
    %c0_i32_1 = arith.constant 0 : i32
    return %arg0, %c0_i32, %c0_i32_0 : i32, i32, i32
  }
}

module attributes {stable_mosaic.version = 11 : i64} {
  func.func @_attention_kernel(%arg0: i32, %arg1: memref<1x17x96xbf16, #tpu.memory_space<vmem>>, %arg2: memref<32x32xbf16, #tpu.memory_space<vmem>>, %arg3: memref<1x32xf32, #tpu.memory_space<vmem>>, %arg4: memref<1x17x32xbf16, #tpu.memory_space<vmem>>, %arg5: memref<1x17x32xbf16, #tpu.memory_space<vmem>>) attributes {dimension_semantics = [#tpu.dimension_semantics<parallel>], iteration_bounds = array<i64: 2>, scalar_prefetch = 0 : i64, scratch_operands = 0 : i64, tpu.core_type = #tpu.core_type<tc>, window_params = [{transform_indices = @transform_0, window_bounds = array<i64: 1, 17, 96>}, {pipeline_mode = #tpu.pipeline_mode<synchronous>, transform_indices = @transform_1, window_bounds = array<i64: 32, 32>}, {pipeline_mode = #tpu.pipeline_mode<synchronous>, transform_indices = @transform_2, window_bounds = array<i64: 1, 32>}, {transform_indices = @transform_3, window_bounds = array<i64: 1, 17, 32>}, {transform_indices = @transform_4, window_bounds = array<i64: 1, 17, 32>}]} {
    %c0 = arith.constant 0 : index
    %c0_0 = arith.constant 0 : index
    %0 = vector.load %arg3[%c0, %c0_0] : memref<1x32xf32, #tpu.memory_space<vmem>>, vector<1x32xf32>
    %c0_1 = arith.constant 0 : index
    %c0_2 = arith.constant 0 : index
    %c0_3 = arith.constant 0 : index
    %1 = vector.load %arg4[%c0_1, %c0_2, %c0_3] : memref<1x17x32xbf16, #tpu.memory_space<vmem>>, vector<1x17x32xbf16>
    %2 = vector.shape_cast %1 : vector<1x17x32xbf16> to vector<17x32xbf16>
    %3 = arith.extf %2 : vector<17x32xbf16> to vector<17x32xf32>
    %4 = vector.broadcast %0 : vector<1x32xf32> to vector<17x32xf32>
    %5 = arith.addf %4, %3 : vector<17x32xf32>
    %c0_4 = arith.constant 0 : index
    %c0_5 = arith.constant 0 : index
    %c0_6 = arith.constant 0 : index
    %6 = vector.load %arg1[%c0_4, %c0_5, %c0_6] : memref<1x17x96xbf16, #tpu.memory_space<vmem>>, vector<1x17x8xbf16>
    %7 = vector.shape_cast %6 : vector<1x17x8xbf16> to vector<17x8xbf16>
    %c0_7 = arith.constant 0 : index
    %c0_8 = arith.constant 0 : index
    %c32 = arith.constant 32 : index
    %8 = vector.load %arg1[%c0_7, %c0_8, %c32] : memref<1x17x96xbf16, #tpu.memory_space<vmem>>, vector<1x17x8xbf16>
    %9 = vector.shape_cast %8 : vector<1x17x8xbf16> to vector<17x8xbf16>
    %c0_9 = arith.constant 0 : index
    %c0_10 = arith.constant 0 : index
    %c64 = arith.constant 64 : index
    %10 = vector.load %arg1[%c0_9, %c0_10, %c64] : memref<1x17x96xbf16, #tpu.memory_space<vmem>>, vector<1x17x8xbf16>
    %11 = vector.shape_cast %10 : vector<1x17x8xbf16> to vector<17x8xbf16>
    %cst = arith.constant dense<0.000000e+00> : vector<17x17xf32>
    %12 = tpu.matmul %7, %9, %cst {dimension_numbers = #tpu.dot_dimension_numbers<[1], [1], [0], [0], [0, 0, 1, 0], [], []>} : vector<17x8xbf16>, vector<17x8xbf16>, vector<17x17xf32> -> vector<17x17xf32>
    %cst_11 = arith.constant 0.353553385 : f32
    %13 = vector.broadcast %cst_11 : f32 to vector<17x17xf32>
    %14 = arith.mulf %12, %13 : vector<17x17xf32>
    %cst_12 = arith.constant dense<0xFF800000> : vector<17xf32>
    %15 = vector.multi_reduction <maximumf>, %14, %cst_12 [1] : vector<17x17xf32> to vector<17xf32>
    %16 = vector.shape_cast %15 : vector<17xf32> to vector<17x1xf32>
    %17 = vector.broadcast %16 : vector<17x1xf32> to vector<17x17xf32>
    %18 = arith.subf %14, %17 : vector<17x17xf32>
    %19 = math.exp %18 : vector<17x17xf32>
    %cst_13 = arith.constant dense<0.000000e+00> : vector<17xf32>
    %20 = vector.multi_reduction <add>, %19, %cst_13 [1] : vector<17x17xf32> to vector<17xf32>
    %21 = vector.shape_cast %20 : vector<17xf32> to vector<17x1xf32>
    %22 = tpu.reciprocal %21 {approx = true} : vector<17x1xf32> -> vector<17x1xf32>
    %23 = vector.broadcast %22 : vector<17x1xf32> to vector<17x17xf32>
    %24 = arith.mulf %19, %23 : vector<17x17xf32>
    %25 = arith.truncf %24 : vector<17x17xf32> to vector<17x17xbf16>
    %cst_14 = arith.constant dense<0.000000e+00> : vector<17x8xf32>
    %26 = tpu.matmul %25, %11, %cst_14 {dimension_numbers = #tpu.dot_dimension_numbers<[1], [0], [0], [1], [0, 0, 1, 1], [], []>} : vector<17x17xbf16>, vector<17x8xbf16>, vector<17x8xf32> -> vector<17x8xf32>
    %c0_15 = arith.constant 0 : index
    %c0_16 = arith.constant 0 : index
    %27 = vector.load %arg2[%c0_15, %c0_16] : memref<32x32xbf16, #tpu.memory_space<vmem>>, vector<8x32xbf16>
    %28 = arith.truncf %26 : vector<17x8xf32> to vector<17x8xbf16>
    %cst_17 = arith.constant dense<0.000000e+00> : vector<17x32xf32>
    %29 = tpu.matmul %28, %27, %cst_17 {dimension_numbers = #tpu.dot_dimension_numbers<[1], [0], [0], [1], [0, 0, 1, 1], [], []>} : vector<17x8xbf16>, vector<8x32xbf16>, vector<17x32xf32> -> vector<17x32xf32>
    %30 = arith.addf %5, %29 : vector<17x32xf32>
    %c0_18 = arith.constant 0 : index
    %c0_19 = arith.constant 0 : index
    %c8 = arith.constant 8 : index
    %31 = vector.load %arg1[%c0_18, %c0_19, %c8] : memref<1x17x96xbf16, #tpu.memory_space<vmem>>, vector<1x17x8xbf16>
    %32 = vector.shape_cast %31 : vector<1x17x8xbf16> to vector<17x8xbf16>
    %c0_20 = arith.constant 0 : index
    %c0_21 = arith.constant 0 : index
    %c40 = arith.constant 40 : index
    %33 = vector.load %arg1[%c0_20, %c0_21, %c40] : memref<1x17x96xbf16, #tpu.memory_space<vmem>>, vector<1x17x8xbf16>
    %34 = vector.shape_cast %33 : vector<1x17x8xbf16> to vector<17x8xbf16>
    %c0_22 = arith.constant 0 : index
    %c0_23 = arith.constant 0 : index
    %c72 = arith.constant 72 : index
    %35 = vector.load %arg1[%c0_22, %c0_23, %c72] : memref<1x17x96xbf16, #tpu.memory_space<vmem>>, vector<1x17x8xbf16>
    %36 = vector.shape_cast %35 : vector<1x17x8xbf16> to vector<17x8xbf16>
    %cst_24 = arith.constant dense<0.000000e+00> : vector<17x17xf32>
    %37 = tpu.matmul %32, %34, %cst_24 {dimension_numbers = #tpu.dot_dimension_numbers<[1], [1], [0], [0], [0, 0, 1, 0], [], []>} : vector<17x8xbf16>, vector<17x8xbf16>, vector<17x17xf32> -> vector<17x17xf32>
    %cst_25 = arith.constant 0.353553385 : f32
    %38 = vector.broadcast %cst_25 : f32 to vector<17x17xf32>
    %39 = arith.mulf %37, %38 : vector<17x17xf32>
    %cst_26 = arith.constant dense<0xFF800000> : vector<17xf32>
    %40 = vector.multi_reduction <maximumf>, %39, %cst_26 [1] : vector<17x17xf32> to vector<17xf32>
    %41 = vector.shape_cast %40 : vector<17xf32> to vector<17x1xf32>
    %42 = vector.broadcast %41 : vector<17x1xf32> to vector<17x17xf32>
    %43 = arith.subf %39, %42 : vector<17x17xf32>
    %44 = math.exp %43 : vector<17x17xf32>
    %cst_27 = arith.constant dense<0.000000e+00> : vector<17xf32>
    %45 = vector.multi_reduction <add>, %44, %cst_27 [1] : vector<17x17xf32> to vector<17xf32>
    %46 = vector.shape_cast %45 : vector<17xf32> to vector<17x1xf32>
    %47 = tpu.reciprocal %46 {approx = true} : vector<17x1xf32> -> vector<17x1xf32>
    %48 = vector.broadcast %47 : vector<17x1xf32> to vector<17x17xf32>
    %49 = arith.mulf %44, %48 : vector<17x17xf32>
    %50 = arith.truncf %49 : vector<17x17xf32> to vector<17x17xbf16>
    %cst_28 = arith.constant dense<0.000000e+00> : vector<17x8xf32>
    %51 = tpu.matmul %50, %36, %cst_28 {dimension_numbers = #tpu.dot_dimension_numbers<[1], [0], [0], [1], [0, 0, 1, 1], [], []>} : vector<17x17xbf16>, vector<17x8xbf16>, vector<17x8xf32> -> vector<17x8xf32>
    %c8_29 = arith.constant 8 : index
    %c0_30 = arith.constant 0 : index
    %52 = vector.load %arg2[%c8_29, %c0_30] : memref<32x32xbf16, #tpu.memory_space<vmem>>, vector<8x32xbf16>
    %53 = arith.truncf %51 : vector<17x8xf32> to vector<17x8xbf16>
    %cst_31 = arith.constant dense<0.000000e+00> : vector<17x32xf32>
    %54 = tpu.matmul %53, %52, %cst_31 {dimension_numbers = #tpu.dot_dimension_numbers<[1], [0], [0], [1], [0, 0, 1, 1], [], []>} : vector<17x8xbf16>, vector<8x32xbf16>, vector<17x32xf32> -> vector<17x32xf32>
    %55 = arith.addf %30, %54 : vector<17x32xf32>
    %c0_32 = arith.constant 0 : index
    %c0_33 = arith.constant 0 : index
    %c16 = arith.constant 16 : index
    %56 = vector.load %arg1[%c0_32, %c0_33, %c16] : memref<1x17x96xbf16, #tpu.memory_space<vmem>>, vector<1x17x8xbf16>
    %57 = vector.shape_cast %56 : vector<1x17x8xbf16> to vector<17x8xbf16>
    %c0_34 = arith.constant 0 : index
    %c0_35 = arith.constant 0 : index
    %c48 = arith.constant 48 : index
    %58 = vector.load %arg1[%c0_34, %c0_35, %c48] : memref<1x17x96xbf16, #tpu.memory_space<vmem>>, vector<1x17x8xbf16>
    %59 = vector.shape_cast %58 : vector<1x17x8xbf16> to vector<17x8xbf16>
    %c0_36 = arith.constant 0 : index
    %c0_37 = arith.constant 0 : index
    %c80 = arith.constant 80 : index
    %60 = vector.load %arg1[%c0_36, %c0_37, %c80] : memref<1x17x96xbf16, #tpu.memory_space<vmem>>, vector<1x17x8xbf16>
    %61 = vector.shape_cast %60 : vector<1x17x8xbf16> to vector<17x8xbf16>
    %cst_38 = arith.constant dense<0.000000e+00> : vector<17x17xf32>
    %62 = tpu.matmul %57, %59, %cst_38 {dimension_numbers = #tpu.dot_dimension_numbers<[1], [1], [0], [0], [0, 0, 1, 0], [], []>} : vector<17x8xbf16>, vector<17x8xbf16>, vector<17x17xf32> -> vector<17x17xf32>
    %cst_39 = arith.constant 0.353553385 : f32
    %63 = vector.broadcast %cst_39 : f32 to vector<17x17xf32>
    %64 = arith.mulf %62, %63 : vector<17x17xf32>
    %cst_40 = arith.constant dense<0xFF800000> : vector<17xf32>
    %65 = vector.multi_reduction <maximumf>, %64, %cst_40 [1] : vector<17x17xf32> to vector<17xf32>
    %66 = vector.shape_cast %65 : vector<17xf32> to vector<17x1xf32>
    %67 = vector.broadcast %66 : vector<17x1xf32> to vector<17x17xf32>
    %68 = arith.subf %64, %67 : vector<17x17xf32>
    %69 = math.exp %68 : vector<17x17xf32>
    %cst_41 = arith.constant dense<0.000000e+00> : vector<17xf32>
    %70 = vector.multi_reduction <add>, %69, %cst_41 [1] : vector<17x17xf32> to vector<17xf32>
    %71 = vector.shape_cast %70 : vector<17xf32> to vector<17x1xf32>
    %72 = tpu.reciprocal %71 {approx = true} : vector<17x1xf32> -> vector<17x1xf32>
    %73 = vector.broadcast %72 : vector<17x1xf32> to vector<17x17xf32>
    %74 = arith.mulf %69, %73 : vector<17x17xf32>
    %75 = arith.truncf %74 : vector<17x17xf32> to vector<17x17xbf16>
    %cst_42 = arith.constant dense<0.000000e+00> : vector<17x8xf32>
    %76 = tpu.matmul %75, %61, %cst_42 {dimension_numbers = #tpu.dot_dimension_numbers<[1], [0], [0], [1], [0, 0, 1, 1], [], []>} : vector<17x17xbf16>, vector<17x8xbf16>, vector<17x8xf32> -> vector<17x8xf32>
    %c16_43 = arith.constant 16 : index
    %c0_44 = arith.constant 0 : index
    %77 = vector.load %arg2[%c16_43, %c0_44] : memref<32x32xbf16, #tpu.memory_space<vmem>>, vector<8x32xbf16>
    %78 = arith.truncf %76 : vector<17x8xf32> to vector<17x8xbf16>
    %cst_45 = arith.constant dense<0.000000e+00> : vector<17x32xf32>
    %79 = tpu.matmul %78, %77, %cst_45 {dimension_numbers = #tpu.dot_dimension_numbers<[1], [0], [0], [1], [0, 0, 1, 1], [], []>} : vector<17x8xbf16>, vector<8x32xbf16>, vector<17x32xf32> -> vector<17x32xf32>
    %80 = arith.addf %55, %79 : vector<17x32xf32>
    %c0_46 = arith.constant 0 : index
    %c0_47 = arith.constant 0 : index
    %c24 = arith.constant 24 : index
    %81 = vector.load %arg1[%c0_46, %c0_47, %c24] : memref<1x17x96xbf16, #tpu.memory_space<vmem>>, vector<1x17x8xbf16>
    %82 = vector.shape_cast %81 : vector<1x17x8xbf16> to vector<17x8xbf16>
    %c0_48 = arith.constant 0 : index
    %c0_49 = arith.constant 0 : index
    %c56 = arith.constant 56 : index
    %83 = vector.load %arg1[%c0_48, %c0_49, %c56] : memref<1x17x96xbf16, #tpu.memory_space<vmem>>, vector<1x17x8xbf16>
    %84 = vector.shape_cast %83 : vector<1x17x8xbf16> to vector<17x8xbf16>
    %c0_50 = arith.constant 0 : index
    %c0_51 = arith.constant 0 : index
    %c88 = arith.constant 88 : index
    %85 = vector.load %arg1[%c0_50, %c0_51, %c88] : memref<1x17x96xbf16, #tpu.memory_space<vmem>>, vector<1x17x8xbf16>
    %86 = vector.shape_cast %85 : vector<1x17x8xbf16> to vector<17x8xbf16>
    %cst_52 = arith.constant dense<0.000000e+00> : vector<17x17xf32>
    %87 = tpu.matmul %82, %84, %cst_52 {dimension_numbers = #tpu.dot_dimension_numbers<[1], [1], [0], [0], [0, 0, 1, 0], [], []>} : vector<17x8xbf16>, vector<17x8xbf16>, vector<17x17xf32> -> vector<17x17xf32>
    %cst_53 = arith.constant 0.353553385 : f32
    %88 = vector.broadcast %cst_53 : f32 to vector<17x17xf32>
    %89 = arith.mulf %87, %88 : vector<17x17xf32>
    %cst_54 = arith.constant dense<0xFF800000> : vector<17xf32>
    %90 = vector.multi_reduction <maximumf>, %89, %cst_54 [1] : vector<17x17xf32> to vector<17xf32>
    %91 = vector.shape_cast %90 : vector<17xf32> to vector<17x1xf32>
    %92 = vector.broadcast %91 : vector<17x1xf32> to vector<17x17xf32>
    %93 = arith.subf %89, %92 : vector<17x17xf32>
    %94 = math.exp %93 : vector<17x17xf32>
    %cst_55 = arith.constant dense<0.000000e+00> : vector<17xf32>
    %95 = vector.multi_reduction <add>, %94, %cst_55 [1] : vector<17x17xf32> to vector<17xf32>
    %96 = vector.shape_cast %95 : vector<17xf32> to vector<17x1xf32>
    %97 = tpu.reciprocal %96 {approx = true} : vector<17x1xf32> -> vector<17x1xf32>
    %98 = vector.broadcast %97 : vector<17x1xf32> to vector<17x17xf32>
    %99 = arith.mulf %94, %98 : vector<17x17xf32>
    %100 = arith.truncf %99 : vector<17x17xf32> to vector<17x17xbf16>
    %cst_56 = arith.constant dense<0.000000e+00> : vector<17x8xf32>
    %101 = tpu.matmul %100, %86, %cst_56 {dimension_numbers = #tpu.dot_dimension_numbers<[1], [0], [0], [1], [0, 0, 1, 1], [], []>} : vector<17x17xbf16>, vector<17x8xbf16>, vector<17x8xf32> -> vector<17x8xf32>
    %c24_57 = arith.constant 24 : index
    %c0_58 = arith.constant 0 : index
    %102 = vector.load %arg2[%c24_57, %c0_58] : memref<32x32xbf16, #tpu.memory_space<vmem>>, vector<8x32xbf16>
    %103 = arith.truncf %101 : vector<17x8xf32> to vector<17x8xbf16>
    %cst_59 = arith.constant dense<0.000000e+00> : vector<17x32xf32>
    %104 = tpu.matmul %103, %102, %cst_59 {dimension_numbers = #tpu.dot_dimension_numbers<[1], [0], [0], [1], [0, 0, 1, 1], [], []>} : vector<17x8xbf16>, vector<8x32xbf16>, vector<17x32xf32> -> vector<17x32xf32>
    %105 = arith.addf %80, %104 : vector<17x32xf32>
    %106 = arith.truncf %105 : vector<17x32xf32> to vector<17x32xbf16>
    %c0_60 = arith.constant 0 : index
    %c0_61 = arith.constant 0 : index
    %c0_62 = arith.constant 0 : index
    %107 = vector.load %arg5[%c0_60, %c0_61, %c0_62] : memref<1x17x32xbf16, #tpu.memory_space<vmem>>, vector<1x17x32xbf16>
    %108 = vector.shape_cast %107 : vector<1x17x32xbf16> to vector<17x32xbf16>
    %109 = vector.shape_cast %106 : vector<17x32xbf16> to vector<1x17x32xbf16>
    tpu.vector_store %arg5[%c0_60, %c0_61, %c0_62], %109 {strides = array<i32>} : memref<1x17x32xbf16, #tpu.memory_space<vmem>>, vector<1x17x32xbf16>,
    return
  }
  func.func @transform_0(%arg0: i32) -> (i32, i32, i32) {
    %c0_i32 = arith.constant 0 : i32
    %c0_i32_0 = arith.constant 0 : i32
    %c0_i32_1 = arith.constant 0 : i32
    return %arg0, %c0_i32, %c0_i32_0 : i32, i32, i32
  }
  func.func @transform_1(%arg0: i32) -> (i32, i32) {
    %c0_i32 = arith.constant 0 : i32
    %c0_i32_0 = arith.constant 0 : i32
    %c0_i32_1 = arith.constant 0 : i32
    return %c0_i32, %c0_i32_0 : i32, i32
  }
  func.func @transform_2(%arg0: i32) -> (i32, i32) {
    %c0_i32 = arith.constant 0 : i32
    %c0_i32_0 = arith.constant 0 : i32
    %c0_i32_1 = arith.constant 0 : i32
    return %c0_i32, %c0_i32_0 : i32, i32
  }
  func.func @transform_3(%arg0: i32) -> (i32, i32, i32) {
    %c0_i32 = arith.constant 0 : i32
    %c0_i32_0 = arith.constant 0 : i32
    %c0_i32_1 = arith.constant 0 : i32
    return %arg0, %c0_i32, %c0_i32_0 : i32, i32, i32
  }
  func.func @transform_4(%arg0: i32) -> (i32, i32, i32) {
    %c0_i32 = arith.constant 0 : i32
    %c0_i32_0 = arith.constant 0 : i32
    %c0_i32_1 = arith.constant 0 : i32
    return %arg0, %c0_i32, %c0_i32_0 : i32, i32, i32
  }
}

module attributes {stable_mosaic.version = 11 : i64} {
  func.func @kernel(%arg0: i32, %arg1: memref<34x32xbf16, #tpu.memory_space<vmem>>, %arg2: memref<1x32xf32, #tpu.memory_space<vmem>>, %arg3: memref<1x32xf32, #tpu.memory_space<vmem>>, %arg4: memref<32x96xbf16, #tpu.memory_space<vmem>>, %arg5: memref<1x96xf32, #tpu.memory_space<vmem>>, %arg6: memref<34x96xbf16, #tpu.memory_space<vmem>>) attributes {dimension_semantics = [#tpu.dimension_semantics<parallel>], iteration_bounds = array<i64: 1>, scalar_prefetch = 0 : i64, scratch_operands = 0 : i64, tpu.core_type = #tpu.core_type<tc>, window_params = [{transform_indices = @transform_0, window_bounds = array<i64: 34, 32>}, {pipeline_mode = #tpu.pipeline_mode<synchronous>, transform_indices = @transform_1, window_bounds = array<i64: 1, 32>}, {pipeline_mode = #tpu.pipeline_mode<synchronous>, transform_indices = @transform_2, window_bounds = array<i64: 1, 32>}, {pipeline_mode = #tpu.pipeline_mode<synchronous>, transform_indices = @transform_3, window_bounds = array<i64: 32, 96>}, {pipeline_mode = #tpu.pipeline_mode<synchronous>, transform_indices = @transform_4, window_bounds = array<i64: 1, 96>}, {transform_indices = @transform_5, window_bounds = array<i64: 34, 96>}]} {
    %c0 = arith.constant 0 : index
    %c0_0 = arith.constant 0 : index
    %0 = vector.load %arg1[%c0, %c0_0] : memref<34x32xbf16, #tpu.memory_space<vmem>>, vector<34x32xbf16>
    %1 = arith.extf %0 : vector<34x32xbf16> to vector<34x32xf32>
    %cst = arith.constant dense<0.000000e+00> : vector<34xf32>
    %2 = vector.multi_reduction <add>, %1, %cst [1] : vector<34x32xf32> to vector<34xf32>
    %3 = vector.shape_cast %2 : vector<34xf32> to vector<34x1xf32>
    %cst_1 = arith.constant 3.200000e+01 : f32
    %4 = vector.broadcast %cst_1 : f32 to vector<34x1xf32>
    %5 = arith.divf %3, %4 : vector<34x1xf32>
    %6 = vector.broadcast %5 : vector<34x1xf32> to vector<34x32xf32>
    %7 = arith.subf %1, %6 : vector<34x32xf32>
    %8 = arith.mulf %7, %7 : vector<34x32xf32>
    %cst_2 = arith.constant dense<0.000000e+00> : vector<34xf32>
    %9 = vector.multi_reduction <add>, %8, %cst_2 [1] : vector<34x32xf32> to vector<34xf32>
    %10 = vector.shape_cast %9 : vector<34xf32> to vector<34x1xf32>
    %cst_3 = arith.constant 3.200000e+01 : f32
    %11 = vector.broadcast %cst_3 : f32 to vector<34x1xf32>
    %12 = arith.divf %10, %11 : vector<34x1xf32>
    %13 = vector.broadcast %5 : vector<34x1xf32> to vector<34x32xf32>
    %14 = arith.subf %1, %13 : vector<34x32xf32>
    %cst_4 = arith.constant 9.99999974E-6 : f32
    %15 = vector.broadcast %cst_4 : f32 to vector<34x1xf32>
    %16 = arith.addf %12, %15 : vector<34x1xf32>
    %17 = math.rsqrt %16 : vector<34x1xf32>
    %18 = vector.broadcast %17 : vector<34x1xf32> to vector<34x32xf32>
    %19 = arith.mulf %14, %18 : vector<34x32xf32>
    %c0_5 = arith.constant 0 : index
    %c0_6 = arith.constant 0 : index
    %20 = vector.load %arg2[%c0_5, %c0_6] : memref<1x32xf32, #tpu.memory_space<vmem>>, vector<1x32xf32>
    %21 = vector.broadcast %20 : vector<1x32xf32> to vector<34x32xf32>
    %22 = arith.mulf %19, %21 : vector<34x32xf32>
    %c0_7 = arith.constant 0 : index
    %c0_8 = arith.constant 0 : index
    %23 = vector.load %arg3[%c0_7, %c0_8] : memref<1x32xf32, #tpu.memory_space<vmem>>, vector<1x32xf32>
    %24 = vector.broadcast %23 : vector<1x32xf32> to vector<34x32xf32>
    %25 = arith.addf %22, %24 : vector<34x32xf32>
    %26 = arith.truncf %25 : vector<34x32xf32> to vector<34x32xbf16>
    %c0_9 = arith.constant 0 : index
    %c0_10 = arith.constant 0 : index
    %27 = vector.load %arg4[%c0_9, %c0_10] : memref<32x96xbf16, #tpu.memory_space<vmem>>, vector<32x96xbf16>
    %cst_11 = arith.constant dense<0.000000e+00> : vector<34x96xf32>
    %28 = tpu.matmul %26, %27, %cst_11 {dimension_numbers = #tpu.dot_dimension_numbers<[1], [0], [0], [1], [0, 0, 1, 1], [], []>} : vector<34x32xbf16>, vector<32x96xbf16>, vector<34x96xf32> -> vector<34x96xf32>
    %c0_12 = arith.constant 0 : index
    %c0_13 = arith.constant 0 : index
    %29 = vector.load %arg5[%c0_12, %c0_13] : memref<1x96xf32, #tpu.memory_space<vmem>>, vector<1x96xf32>
    %30 = vector.broadcast %29 : vector<1x96xf32> to vector<34x96xf32>
    %31 = arith.addf %28, %30 : vector<34x96xf32>
    %32 = arith.truncf %31 : vector<34x96xf32> to vector<34x96xbf16>
    %c0_14 = arith.constant 0 : index
    %c0_15 = arith.constant 0 : index
    %33 = vector.load %arg6[%c0_14, %c0_15] : memref<34x96xbf16, #tpu.memory_space<vmem>>, vector<34x96xbf16>
    tpu.vector_store %arg6[%c0_14, %c0_15], %32 {strides = array<i32>} : memref<34x96xbf16, #tpu.memory_space<vmem>>, vector<34x96xbf16>,
    return
  }
  func.func @transform_0(%arg0: i32) -> (i32, i32) {
    %c0_i32 = arith.constant 0 : i32
    %c0_i32_0 = arith.constant 0 : i32
    return %arg0, %c0_i32 : i32, i32
  }
  func.func @transform_1(%arg0: i32) -> (i32, i32) {
    %c0_i32 = arith.constant 0 : i32
    %c0_i32_0 = arith.constant 0 : i32
    %c0_i32_1 = arith.constant 0 : i32
    return %c0_i32, %c0_i32_0 : i32, i32
  }
  func.func @transform_2(%arg0: i32) -> (i32, i32) {
    %c0_i32 = arith.constant 0 : i32
    %c0_i32_0 = arith.constant 0 : i32
    %c0_i32_1 = arith.constant 0 : i32
    return %c0_i32, %c0_i32_0 : i32, i32
  }
  func.func @transform_3(%arg0: i32) -> (i32, i32) {
    %c0_i32 = arith.constant 0 : i32
    %c0_i32_0 = arith.constant 0 : i32
    %c0_i32_1 = arith.constant 0 : i32
    return %c0_i32, %c0_i32_0 : i32, i32
  }
  func.func @transform_4(%arg0: i32) -> (i32, i32) {
    %c0_i32 = arith.constant 0 : i32
    %c0_i32_0 = arith.constant 0 : i32
    %c0_i32_1 = arith.constant 0 : i32
    return %c0_i32, %c0_i32_0 : i32, i32
  }
  func.func @transform_5(%arg0: i32) -> (i32, i32) {
    %c0_i32 = arith.constant 0 : i32
    %c0_i32_0 = arith.constant 0 : i32
    return %arg0, %c0_i32 : i32, i32
  }
}

module attributes {stable_mosaic.version = 11 : i64} {
  func.func @kernel(%arg0: i32, %arg1: memref<34x32xbf16, #tpu.memory_space<vmem>>, %arg2: memref<1x32xf32, #tpu.memory_space<vmem>>, %arg3: memref<1x32xf32, #tpu.memory_space<vmem>>, %arg4: memref<32x128xbf16, #tpu.memory_space<vmem>>, %arg5: memref<1x128xf32, #tpu.memory_space<vmem>>, %arg6: memref<34x128xbf16, #tpu.memory_space<vmem>>) attributes {dimension_semantics = [#tpu.dimension_semantics<parallel>], iteration_bounds = array<i64: 1>, scalar_prefetch = 0 : i64, scratch_operands = 0 : i64, tpu.core_type = #tpu.core_type<tc>, window_params = [{transform_indices = @transform_0, window_bounds = array<i64: 34, 32>}, {pipeline_mode = #tpu.pipeline_mode<synchronous>, transform_indices = @transform_1, window_bounds = array<i64: 1, 32>}, {pipeline_mode = #tpu.pipeline_mode<synchronous>, transform_indices = @transform_2, window_bounds = array<i64: 1, 32>}, {pipeline_mode = #tpu.pipeline_mode<synchronous>, transform_indices = @transform_3, window_bounds = array<i64: 32, 128>}, {pipeline_mode = #tpu.pipeline_mode<synchronous>, transform_indices = @transform_4, window_bounds = array<i64: 1, 128>}, {transform_indices = @transform_5, window_bounds = array<i64: 34, 128>}]} {
    %c0 = arith.constant 0 : index
    %c0_0 = arith.constant 0 : index
    %0 = vector.load %arg1[%c0, %c0_0] : memref<34x32xbf16, #tpu.memory_space<vmem>>, vector<34x32xbf16>
    %1 = arith.extf %0 : vector<34x32xbf16> to vector<34x32xf32>
    %cst = arith.constant dense<0.000000e+00> : vector<34xf32>
    %2 = vector.multi_reduction <add>, %1, %cst [1] : vector<34x32xf32> to vector<34xf32>
    %3 = vector.shape_cast %2 : vector<34xf32> to vector<34x1xf32>
    %cst_1 = arith.constant 3.200000e+01 : f32
    %4 = vector.broadcast %cst_1 : f32 to vector<34x1xf32>
    %5 = arith.divf %3, %4 : vector<34x1xf32>
    %6 = vector.broadcast %5 : vector<34x1xf32> to vector<34x32xf32>
    %7 = arith.subf %1, %6 : vector<34x32xf32>
    %8 = arith.mulf %7, %7 : vector<34x32xf32>
    %cst_2 = arith.constant dense<0.000000e+00> : vector<34xf32>
    %9 = vector.multi_reduction <add>, %8, %cst_2 [1] : vector<34x32xf32> to vector<34xf32>
    %10 = vector.shape_cast %9 : vector<34xf32> to vector<34x1xf32>
    %cst_3 = arith.constant 3.200000e+01 : f32
    %11 = vector.broadcast %cst_3 : f32 to vector<34x1xf32>
    %12 = arith.divf %10, %11 : vector<34x1xf32>
    %13 = vector.broadcast %5 : vector<34x1xf32> to vector<34x32xf32>
    %14 = arith.subf %1, %13 : vector<34x32xf32>
    %cst_4 = arith.constant 9.99999974E-6 : f32
    %15 = vector.broadcast %cst_4 : f32 to vector<34x1xf32>
    %16 = arith.addf %12, %15 : vector<34x1xf32>
    %17 = math.rsqrt %16 : vector<34x1xf32>
    %18 = vector.broadcast %17 : vector<34x1xf32> to vector<34x32xf32>
    %19 = arith.mulf %14, %18 : vector<34x32xf32>
    %c0_5 = arith.constant 0 : index
    %c0_6 = arith.constant 0 : index
    %20 = vector.load %arg2[%c0_5, %c0_6] : memref<1x32xf32, #tpu.memory_space<vmem>>, vector<1x32xf32>
    %21 = vector.broadcast %20 : vector<1x32xf32> to vector<34x32xf32>
    %22 = arith.mulf %19, %21 : vector<34x32xf32>
    %c0_7 = arith.constant 0 : index
    %c0_8 = arith.constant 0 : index
    %23 = vector.load %arg3[%c0_7, %c0_8] : memref<1x32xf32, #tpu.memory_space<vmem>>, vector<1x32xf32>
    %24 = vector.broadcast %23 : vector<1x32xf32> to vector<34x32xf32>
    %25 = arith.addf %22, %24 : vector<34x32xf32>
    %26 = arith.truncf %25 : vector<34x32xf32> to vector<34x32xbf16>
    %c0_9 = arith.constant 0 : index
    %c0_10 = arith.constant 0 : index
    %27 = vector.load %arg4[%c0_9, %c0_10] : memref<32x128xbf16, #tpu.memory_space<vmem>>, vector<32x128xbf16>
    %cst_11 = arith.constant dense<0.000000e+00> : vector<34x128xf32>
    %28 = tpu.matmul %26, %27, %cst_11 {dimension_numbers = #tpu.dot_dimension_numbers<[1], [0], [0], [1], [0, 0, 1, 1], [], []>} : vector<34x32xbf16>, vector<32x128xbf16>, vector<34x128xf32> -> vector<34x128xf32>
    %c0_12 = arith.constant 0 : index
    %c0_13 = arith.constant 0 : index
    %29 = vector.load %arg5[%c0_12, %c0_13] : memref<1x128xf32, #tpu.memory_space<vmem>>, vector<1x128xf32>
    %30 = vector.broadcast %29 : vector<1x128xf32> to vector<34x128xf32>
    %31 = arith.addf %28, %30 : vector<34x128xf32>
    %32 = arith.mulf %31, %31 : vector<34x128xf32>
    %33 = arith.mulf %31, %32 : vector<34x128xf32>
    %cst_14 = arith.constant 4.471500e-02 : f32
    %34 = vector.broadcast %cst_14 : f32 to vector<34x128xf32>
    %35 = arith.mulf %34, %33 : vector<34x128xf32>
    %36 = arith.addf %31, %35 : vector<34x128xf32>
    %cst_15 = arith.constant 0.797884583 : f32
    %37 = vector.broadcast %cst_15 : f32 to vector<34x128xf32>
    %38 = arith.mulf %37, %36 : vector<34x128xf32>
    %39 = math.tanh %38 : vector<34x128xf32>
    %cst_16 = arith.constant 1.000000e+00 : f32
    %40 = vector.broadcast %cst_16 : f32 to vector<34x128xf32>
    %41 = arith.addf %40, %39 : vector<34x128xf32>
    %cst_17 = arith.constant 5.000000e-01 : f32
    %42 = vector.broadcast %cst_17 : f32 to vector<34x128xf32>
    %43 = arith.mulf %42, %41 : vector<34x128xf32>
    %44 = arith.mulf %31, %43 : vector<34x128xf32>
    %45 = arith.truncf %44 : vector<34x128xf32> to vector<34x128xbf16>
    %c0_18 = arith.constant 0 : index
    %c0_19 = arith.constant 0 : index
    %46 = vector.load %arg6[%c0_18, %c0_19] : memref<34x128xbf16, #tpu.memory_space<vmem>>, vector<34x128xbf16>
    tpu.vector_store %arg6[%c0_18, %c0_19], %45 {strides = array<i32>} : memref<34x128xbf16, #tpu.memory_space<vmem>>, vector<34x128xbf16>,
    return
  }
  func.func @transform_0(%arg0: i32) -> (i32, i32) {
    %c0_i32 = arith.constant 0 : i32
    %c0_i32_0 = arith.constant 0 : i32
    return %arg0, %c0_i32 : i32, i32
  }
  func.func @transform_1(%arg0: i32) -> (i32, i32) {
    %c0_i32 = arith.constant 0 : i32
    %c0_i32_0 = arith.constant 0 : i32
    %c0_i32_1 = arith.constant 0 : i32
    return %c0_i32, %c0_i32_0 : i32, i32
  }
  func.func @transform_2(%arg0: i32) -> (i32, i32) {
    %c0_i32 = arith.constant 0 : i32
    %c0_i32_0 = arith.constant 0 : i32
    %c0_i32_1 = arith.constant 0 : i32
    return %c0_i32, %c0_i32_0 : i32, i32
  }
  func.func @transform_3(%arg0: i32) -> (i32, i32) {
    %c0_i32 = arith.constant 0 : i32
    %c0_i32_0 = arith.constant 0 : i32
    %c0_i32_1 = arith.constant 0 : i32
    return %c0_i32, %c0_i32_0 : i32, i32
  }
  func.func @transform_4(%arg0: i32) -> (i32, i32) {
    %c0_i32 = arith.constant 0 : i32
    %c0_i32_0 = arith.constant 0 : i32
    %c0_i32_1 = arith.constant 0 : i32
    return %c0_i32, %c0_i32_0 : i32, i32
  }
  func.func @transform_5(%arg0: i32) -> (i32, i32) {
    %c0_i32 = arith.constant 0 : i32
    %c0_i32_0 = arith.constant 0 : i32
    return %arg0, %c0_i32 : i32, i32
  }
}

module attributes {stable_mosaic.version = 11 : i64} {
  func.func @kernel(%arg0: i32, %arg1: memref<34x128xbf16, #tpu.memory_space<vmem>>, %arg2: memref<128x32xbf16, #tpu.memory_space<vmem>>, %arg3: memref<1x32xf32, #tpu.memory_space<vmem>>, %arg4: memref<34x32xbf16, #tpu.memory_space<vmem>>, %arg5: memref<34x32xbf16, #tpu.memory_space<vmem>>) attributes {dimension_semantics = [#tpu.dimension_semantics<parallel>], iteration_bounds = array<i64: 1>, scalar_prefetch = 0 : i64, scratch_operands = 0 : i64, tpu.core_type = #tpu.core_type<tc>, window_params = [{transform_indices = @transform_0, window_bounds = array<i64: 34, 128>}, {pipeline_mode = #tpu.pipeline_mode<synchronous>, transform_indices = @transform_1, window_bounds = array<i64: 128, 32>}, {pipeline_mode = #tpu.pipeline_mode<synchronous>, transform_indices = @transform_2, window_bounds = array<i64: 1, 32>}, {transform_indices = @transform_3, window_bounds = array<i64: 34, 32>}, {transform_indices = @transform_4, window_bounds = array<i64: 34, 32>}]} {
    %c0 = arith.constant 0 : index
    %c0_0 = arith.constant 0 : index
    %0 = vector.load %arg1[%c0, %c0_0] : memref<34x128xbf16, #tpu.memory_space<vmem>>, vector<34x128xbf16>
    %c0_1 = arith.constant 0 : index
    %c0_2 = arith.constant 0 : index
    %1 = vector.load %arg2[%c0_1, %c0_2] : memref<128x32xbf16, #tpu.memory_space<vmem>>, vector<128x32xbf16>
    %cst = arith.constant dense<0.000000e+00> : vector<34x32xf32>
    %2 = tpu.matmul %0, %1, %cst {dimension_numbers = #tpu.dot_dimension_numbers<[1], [0], [0], [1], [0, 0, 1, 1], [], []>} : vector<34x128xbf16>, vector<128x32xbf16>, vector<34x32xf32> -> vector<34x32xf32>
    %c0_3 = arith.constant 0 : index
    %c0_4 = arith.constant 0 : index
    %3 = vector.load %arg3[%c0_3, %c0_4] : memref<1x32xf32, #tpu.memory_space<vmem>>, vector<1x32xf32>
    %4 = vector.broadcast %3 : vector<1x32xf32> to vector<34x32xf32>
    %5 = arith.addf %2, %4 : vector<34x32xf32>
    %c0_5 = arith.constant 0 : index
    %c0_6 = arith.constant 0 : index
    %6 = vector.load %arg4[%c0_5, %c0_6] : memref<34x32xbf16, #tpu.memory_space<vmem>>, vector<34x32xbf16>
    %7 = arith.extf %6 : vector<34x32xbf16> to vector<34x32xf32>
    %8 = arith.addf %5, %7 : vector<34x32xf32>
    %9 = arith.truncf %8 : vector<34x32xf32> to vector<34x32xbf16>
    %c0_7 = arith.constant 0 : index
    %c0_8 = arith.constant 0 : index
    %10 = vector.load %arg5[%c0_7, %c0_8] : memref<34x32xbf16, #tpu.memory_space<vmem>>, vector<34x32xbf16>
    tpu.vector_store %arg5[%c0_7, %c0_8], %9 {strides = array<i32>} : memref<34x32xbf16, #tpu.memory_space<vmem>>, vector<34x32xbf16>,
    return
  }
  func.func @transform_0(%arg0: i32) -> (i32, i32) {
    %c0_i32 = arith.constant 0 : i32
    %c0_i32_0 = arith.constant 0 : i32
    return %arg0, %c0_i32 : i32, i32
  }
  func.func @transform_1(%arg0: i32) -> (i32, i32) {
    %c0_i32 = arith.constant 0 : i32
    %c0_i32_0 = arith.constant 0 : i32
    %c0_i32_1 = arith.constant 0 : i32
    return %c0_i32, %c0_i32_0 : i32, i32
  }
  func.func @transform_2(%arg0: i32) -> (i32, i32) {
    %c0_i32 = arith.constant 0 : i32
    %c0_i32_0 = arith.constant 0 : i32
    %c0_i32_1 = arith.constant 0 : i32
    return %c0_i32, %c0_i32_0 : i32, i32
  }
  func.func @transform_3(%arg0: i32) -> (i32, i32) {
    %c0_i32 = arith.constant 0 : i32
    %c0_i32_0 = arith.constant 0 : i32
    return %arg0, %c0_i32 : i32, i32
  }
  func.func @transform_4(%arg0: i32) -> (i32, i32) {
    %c0_i32 = arith.constant 0 : i32
    %c0_i32_0 = arith.constant 0 : i32
    return %arg0, %c0_i32 : i32, i32
  }
}

module attributes {stable_mosaic.version = 11 : i64} {
  func.func @kernel(%arg0: i32, %arg1: memref<2x32xbf16, #tpu.memory_space<vmem>>, %arg2: memref<32x10xbf16, #tpu.memory_space<vmem>>, %arg3: memref<1x10xf32, #tpu.memory_space<vmem>>, %arg4: memref<2x10xf32, #tpu.memory_space<vmem>>) attributes {dimension_semantics = [#tpu.dimension_semantics<parallel>], iteration_bounds = array<i64: 1>, scalar_prefetch = 0 : i64, scratch_operands = 0 : i64, tpu.core_type = #tpu.core_type<tc>, window_params = [{transform_indices = @transform_0, window_bounds = array<i64: 2, 32>}, {pipeline_mode = #tpu.pipeline_mode<synchronous>, transform_indices = @transform_1, window_bounds = array<i64: 32, 10>}, {pipeline_mode = #tpu.pipeline_mode<synchronous>, transform_indices = @transform_2, window_bounds = array<i64: 1, 10>}, {transform_indices = @transform_3, window_bounds = array<i64: 2, 10>}]} {
    %c0 = arith.constant 0 : index
    %c0_0 = arith.constant 0 : index
    %0 = vector.load %arg1[%c0, %c0_0] : memref<2x32xbf16, #tpu.memory_space<vmem>>, vector<2x32xbf16>
    %c0_1 = arith.constant 0 : index
    %c0_2 = arith.constant 0 : index
    %1 = vector.load %arg2[%c0_1, %c0_2] : memref<32x10xbf16, #tpu.memory_space<vmem>>, vector<32x10xbf16>
    %cst = arith.constant dense<0.000000e+00> : vector<2x10xf32>
    %2 = tpu.matmul %0, %1, %cst {dimension_numbers = #tpu.dot_dimension_numbers<[1], [0], [0], [1], [0, 0, 1, 1], [], []>} : vector<2x32xbf16>, vector<32x10xbf16>, vector<2x10xf32> -> vector<2x10xf32>
    %c0_3 = arith.constant 0 : index
    %c0_4 = arith.constant 0 : index
    %3 = vector.load %arg3[%c0_3, %c0_4] : memref<1x10xf32, #tpu.memory_space<vmem>>, vector<1x10xf32>
    %4 = vector.broadcast %3 : vector<1x10xf32> to vector<2x10xf32>
    %5 = arith.addf %2, %4 : vector<2x10xf32>
    %cst_5 = arith.constant dense<0xFF800000> : vector<2xf32>
    %6 = vector.multi_reduction <maximumf>, %5, %cst_5 [1] : vector<2x10xf32> to vector<2xf32>
    %7 = vector.shape_cast %6 : vector<2xf32> to vector<2x1xf32>
    %8 = vector.broadcast %7 : vector<2x1xf32> to vector<2x10xf32>
    %9 = arith.subf %5, %8 : vector<2x10xf32>
    %10 = math.exp %9 : vector<2x10xf32>
    %cst_6 = arith.constant dense<0.000000e+00> : vector<2xf32>
    %11 = vector.multi_reduction <add>, %10, %cst_6 [1] : vector<2x10xf32> to vector<2xf32>
    %12 = vector.shape_cast %11 : vector<2xf32> to vector<2x1xf32>
    %13 = vector.broadcast %12 : vector<2x1xf32> to vector<2x10xf32>
    %14 = arith.divf %10, %13 : vector<2x10xf32>
    %c0_7 = arith.constant 0 : index
    %c0_8 = arith.constant 0 : index
    %15 = vector.load %arg4[%c0_7, %c0_8] : memref<2x10xf32, #tpu.memory_space<vmem>>, vector<2x10xf32>
    tpu.vector_store %arg4[%c0_7, %c0_8], %14 {strides = array<i32>} : memref<2x10xf32, #tpu.memory_space<vmem>>, vector<2x10xf32>,
    return
  }
  func.func @transform_0(%arg0: i32) -> (i32, i32) {
    %c0_i32 = arith.constant 0 : i32
    %c0_i32_0 = arith.constant 0 : i32
    return %arg0, %c0_i32 : i32, i32
  }
  func.func @transform_1(%arg0: i32) -> (i32, i32) {
    %c0_i32 = arith.constant 0 : i32
    %c0_i32_0 = arith.constant 0 : i32
    %c0_i32_1 = arith.constant 0 : i32
    return %c0_i32, %c0_i32_0 : i32, i32
  }
  func.func @transform_2(%arg0: i32) -> (i32, i32) {
    %c0_i32 = arith.constant 0 : i32
    %c0_i32_0 = arith.constant 0 : i32
    %c0_i32_1 = arith.constant 0 : i32
    return %c0_i32, %c0_i32_0 : i32, i32
  }
  func.func @transform_3(%arg0: i32) -> (i32, i32) {
    %c0_i32 = arith.constant 0 : i32
    %c0_i32_0 = arith.constant 0 : i32
    return %arg0, %c0_i32 : i32, i32
  }
}

</mosaic_0001>

<llo_original>
// kernel: vit_forward.10
$region0: #{vit_forward.10}
  #allocation0 [shape = 'u32[]', space=smem, size = 0x4, offset = 0x4, fixed_abs, tag = 'smem constant byte address 0x4 - core index']
  #allocation1 [shape = 'u32[72,128]{1,0:T(1,128)}', space=vmem, size = 0x9000, scoped, tag = 'internal scratch']
  %s0 = inlined_call_operand.vmem [shape: bf16[2,16,48], index: 0, kind: input, shape index: {}]
  %s1 = inlined_call_operand.vmem [shape: bf16[48,32], index: 1, kind: input, shape index: {}]
  %s2 = inlined_call_operand.vmem [shape: f32[1,32], index: 2, kind: input, shape index: {}]
  %s3 = inlined_call_operand.vmem [shape: f32[16,32], index: 3, kind: input, shape index: {}]
  %s4 = inlined_call_operand.vmem [shape: f32[1,32], index: 4, kind: input, shape index: {}]
  %s5 = inlined_call_operand.vmem [shape: bf16[2,17,32], index: 5, kind: output, shape index: {}]
  %s6 = sld [smem:[#allocation0]]
  $region53: #{vit_forward.10} parent=0
    _
  %s8 = ssub.s32 1, %s6
  %s9 = scalar_select 0, %s8, %s6
  loop: start=0, step=1, limit=4
  $region2: #{vit_forward.10} parent=0 // loop_pre_header
    _
  $region3: #{vit_forward.10} parent=0 // loop_header
    %s11 = sphi 0, %s15
    %p12 = scmp.ge.s32.totalorder %s11, 4
    %s21 = sphi 0, %s23
    %s24 = sphi 0, %s21
    %s25 = sphi 0, %s24
    %s41 = sphi 0, %s25
    %s45 = sphi 0, %s45
    %s47 = sphi 0, %s45
    %s48 = sphi 0, %s47
    %s62 = sphi 0, %s48
    %s66 = sphi 0, %s66
    %s68 = sphi 0, %s66
    %s69 = sphi 0, %s68
    %s83 = sphi 0, %s69
    %s87 = sphi 0, %s87
    %s89 = sphi 0, %s87
    %s90 = sphi 0, %s89
    %s104 = sphi 0, %s90
    %s108 = sphi 0, %s108
    %s110 = sphi 0, %s108
    %s111 = sphi 0, %s110
    %s125 = sphi 0, %s111
    %s131 = sphi 0, %s133
    %s134 = sphi 0, %s131
    %s135 = sphi 0, %s134
    %s151 = sphi 0, %s135
  $region4: #{vit_forward.10} parent=0 // loop_header_branch
    %14 = sbr.rel (%p12) target = $region8
  $region5: #{vit_forward.10} parent=0 // loop_body
    %s16 = ssub.s32 %s11, 1
    %s17 = ssub.s32 %s11, 2
    %s18 = sadd.s32 %s11, 1
    %s19 = ssub.s32 %s11, %s18
    %p20 = scmp.eq.s32.totalorder %s19, 0
    %s22 = sadd.s32 %s21, 1
    %s23 = scalar_select %p20, %s21, %s22
    %p26 = pneg %p20
    %p27 = scmp.eq.s32.totalorder %s11, 1
    %p28 = por %p26, %p27
    %p29 = scmp.ne.s32.totalorder %s21, %s24
    %p30 = scmp.eq.s32.totalorder %s11, 0
    %p31 = por %p29, %p30
    %p32 = scmp.ne.s32.totalorder %s21, %s24
    %p33 = scmp.eq.s32.totalorder %s16, 1
    %p34 = por %p32, %p33
    %p35 = scmp.ne.s32.totalorder %s24, %s25
    %p36 = scmp.eq.s32.totalorder %s16, 0
    %p37 = por %p35, %p36
    %p38 = scmp.ne.s32.totalorder %s24, %s25
    %p39 = scmp.eq.s32.totalorder %s17, 1
    %p40 = por %p38, %p39
    %p42 = scmp.ne.s32.totalorder %s25, %s41
    %p43 = scmp.eq.s32.totalorder %s17, 0
    %p44 = por %p42, %p43
    %s46 = sadd.s32 %s45, 1
    %p49 = scmp.eq.s32.totalorder %s11, 1
    %p50 = scmp.ne.s32.totalorder %s45, %s47
    %p51 = scmp.eq.s32.totalorder %s11, 0
    %p52 = por %p50, %p51
    %p53 = scmp.ne.s32.totalorder %s45, %s47
    %p54 = scmp.eq.s32.totalorder %s16, 1
    %p55 = por %p53, %p54
    %p56 = scmp.ne.s32.totalorder %s47, %s48
    %p57 = scmp.eq.s32.totalorder %s16, 0
    %p58 = por %p56, %p57
    %p59 = scmp.ne.s32.totalorder %s47, %s48
    %p60 = scmp.eq.s32.totalorder %s17, 1
    %p61 = por %p59, %p60
    %p63 = scmp.ne.s32.totalorder %s48, %s62
    %p64 = scmp.eq.s32.totalorder %s17, 0
    %p65 = por %p63, %p64
    %s67 = sadd.s32 %s66, 1
    %p70 = scmp.eq.s32.totalorder %s11, 1
    %p71 = scmp.ne.s32.totalorder %s66, %s68
    %p72 = scmp.eq.s32.totalorder %s11, 0
    %p73 = por %p71, %p72
    %p74 = scmp.ne.s32.totalorder %s66, %s68
    %p75 = scmp.eq.s32.totalorder %s16, 1
    %p76 = por %p74, %p75
    %p77 = scmp.ne.s32.totalorder %s68, %s69
    %p78 = scmp.eq.s32.totalorder %s16, 0
    %p79 = por %p77, %p78
    %p80 = scmp.ne.s32.totalorder %s68, %s69
    %p81 = scmp.eq.s32.totalorder %s17, 1
    %p82 = por %p80, %p81
    %p84 = scmp.ne.s32.totalorder %s69, %s83
    %p85 = scmp.eq.s32.totalorder %s17, 0
    %p86 = por %p84, %p85
    %s88 = sadd.s32 %s87, 1
    %p91 = scmp.eq.s32.totalorder %s11, 1
    %p92 = scmp.ne.s32.totalorder %s87, %s89
    %p93 = scmp.eq.s32.totalorder %s11, 0
    %p94 = por %p92, %p93
    %p95 = scmp.ne.s32.totalorder %s87, %s89
    %p96 = scmp.eq.s32.totalorder %s16, 1
    %p97 = por %p95, %p96
    %p98 = scmp.ne.s32.totalorder %s89, %s90
    %p99 = scmp.eq.s32.totalorder %s16, 0
    %p100 = por %p98, %p99
    %p101 = scmp.ne.s32.totalorder %s89, %s90
    %p102 = scmp.eq.s32.totalorder %s17, 1
    %p103 = por %p101, %p102
    %p105 = scmp.ne.s32.totalorder %s90, %s104
    %p106 = scmp.eq.s32.totalorder %s17, 0
    %p107 = por %p105, %p106
    %s109 = sadd.s32 %s108, 1
    %p112 = scmp.eq.s32.totalorder %s11, 1
    %p113 = scmp.ne.s32.totalorder %s108, %s110
    %p114 = scmp.eq.s32.totalorder %s11, 0
    %p115 = por %p113, %p114
    %p116 = scmp.ne.s32.totalorder %s108, %s110
    %p117 = scmp.eq.s32.totalorder %s16, 1
    %p118 = por %p116, %p117
    %p119 = scmp.ne.s32.totalorder %s110, %s111
    %p120 = scmp.eq.s32.totalorder %s16, 0
    %p121 = por %p119, %p120
    %p122 = scmp.ne.s32.totalorder %s110, %s111
    %p123 = scmp.eq.s32.totalorder %s17, 1
    %p124 = por %p122, %p123
    %p126 = scmp.ne.s32.totalorder %s111, %s125
    %p127 = scmp.eq.s32.totalorder %s17, 0
    %p128 = por %p126, %p127
    %s129 = ssub.s32 %s11, %s18
    %p130 = scmp.eq.s32.totalorder %s129, 0
    %s132 = sadd.s32 %s131, 1
    %s133 = scalar_select %p130, %s131, %s132
    %p136 = pneg %p130
    %p137 = scmp.eq.s32.totalorder %s11, 1
    %p138 = por %p136, %p137
    %p139 = scmp.ne.s32.totalorder %s131, %s134
    %p140 = scmp.eq.s32.totalorder %s11, 0
    %p141 = por %p139, %p140
    %p142 = scmp.ne.s32.totalorder %s131, %s134
    %p143 = scmp.eq.s32.totalorder %s16, 1
    %p144 = por %p142, %p143
    %p145 = scmp.ne.s32.totalorder %s134, %s135
    %p146 = scmp.eq.s32.totalorder %s16, 0
    %p147 = por %p145, %p146
    %p148 = scmp.ne.s32.totalorder %s134, %s135
    %p149 = scmp.eq.s32.totalorder %s17, 1
    %p150 = por %p148, %p149
    %p152 = scmp.ne.s32.totalorder %s135, %s151
    %p153 = scmp.eq.s32.totalorder %s17, 0
    %p154 = por %p152, %p153
    %p155 = scmp.le.s32.totalorder 1, %s11
    %p156 = scmp.lt.s32.totalorder %s11, 3
    %p157 = pnand %p155, %p156
    %p158 = pneg %p157
    // Predicated region
    $region9: #{vit_forward.10} parent=5 // pred_check
      _
    $region10: #{vit_forward.10} parent=5 // pred_check_branch
      %160 = sbr.rel (%p157) target = $region12
    $region11: #{vit_forward.10} parent=5 // pred_region
      %s161 = ssub.s32 %s11, 1
      // Predicated region
      $region13: #{vit_forward.10} parent=11 // pred_check
        %p162 = pneg %p58
      $region14: #{vit_forward.10} parent=11 // pred_check_branch
        %164 = sbr.rel (%p162) target = $region16
      $region15: #{vit_forward.10} parent=11 // pred_region
        _
      $region16: #{vit_forward.10} parent=11 // pred_fallthru
        _
      // Predicated region
      $region17: #{vit_forward.10} parent=11 // pred_check
        %p165 = pneg %p79
      $region18: #{vit_forward.10} parent=11 // pred_check_branch
        %167 = sbr.rel (%p165) target = $region20
      $region19: #{vit_forward.10} parent=11 // pred_region
        _
      $region20: #{vit_forward.10} parent=11 // pred_fallthru
        _
      // Predicated region
      $region21: #{vit_forward.10} parent=11 // pred_check
        %p168 = pneg %p100
      $region22: #{vit_forward.10} parent=11 // pred_check_branch
        %170 = sbr.rel (%p168) target = $region24
      $region23: #{vit_forward.10} parent=11 // pred_region
        _
      $region24: #{vit_forward.10} parent=11 // pred_fallthru
        _
      // Predicated region
      $region25: #{vit_forward.10} parent=11 // pred_check
        %p171 = pneg %p121
      $region26: #{vit_forward.10} parent=11 // pred_check_branch
        %173 = sbr.rel (%p171) target = $region28
      $region27: #{vit_forward.10} parent=11 // pred_region
        _
      $region28: #{vit_forward.10} parent=11 // pred_fallthru
        _
    $region12: #{vit_forward.10} parent=5 // pred_fallthru
      _
    %p174 = scmp.lt.s32.totalorder %s11, 2
    // Predicated region
    $region29: #{vit_forward.10} parent=5 // pred_check
      %p175 = pneg %p174
    $region30: #{vit_forward.10} parent=5 // pred_check_branch
      %177 = sbr.rel (%p175) target = $region32
    $region31: #{vit_forward.10} parent=5 // pred_region
      // Predicated region
      $region33: #{vit_forward.10} parent=31 // pred_check
        %p178 = pneg %p31
      $region34: #{vit_forward.10} parent=31 // pred_check_branch
        %180 = sbr.rel (%p178) target = $region36
      $region35: #{vit_forward.10} parent=31 // pred_region
        %p181 = scmp.lt.s32.totalorder %s11, 1
        %s182 = scalar_select %p181, %s11, 1
        %s183 = smul.addr %s182, 2
        %s184 = smul.addr %s183, 4
        %s185 = scalar_lea.vmem %s0, %s184
      $region36: #{vit_forward.10} parent=31 // pred_fallthru
        _
    $region32: #{vit_forward.10} parent=5 // pred_fallthru
      _
    %p186 = scmp.le.s32.totalorder 1, %s11
    %p187 = scmp.lt.s32.totalorder %s11, 3
    %p188 = pnand %p186, %p187
    %p189 = pneg %p188
    // Predicated region
    $region37: #{vit_forward.10} parent=5 // pred_check
      _
    $region38: #{vit_forward.10} parent=5 // pred_check_branch
      %191 = sbr.rel (%p188) target = $region40
    $region39: #{vit_forward.10} parent=5 // pred_region
      %s192 = ssub.s32 %s11, 1
      %p193 = scmp.lt.s32.totalorder %s16, 1
      %s194 = scalar_select %p193, %s16, 1
      %s195 = smul.addr %s194, 2
      %s196 = smul.addr %s195, 4
      %s197 = scalar_lea.vmem %s0, %s196
      %p198 = pneg %p37
      %p199 = pneg %p34
      %p200 = pneg %p58
      %p201 = pneg %p55
      %p202 = pneg %p79
      %p203 = pneg %p76
      %p204 = pneg %p100
      %p205 = pneg %p97
      %p206 = pneg %p121
      %p207 = pneg %p118
      %p208 = pneg %p147
      %p209 = pneg %p144
      %p210 = scmp.lt.s32.totalorder %s16, 1
      %s211 = scalar_select %p210, %s16, 1
      %s212 = smul.addr %s211, 3
      %s213 = smul.addr %s212, 4
      %s214 = scalar_lea.vmem %s5, %s213
      %p215 = scmp.lt.s32.totalorder %s16, 1
      %s216 = scalar_select %p215, %s16, 1
      %s217 = smul.addr %s216, 2
      %s218 = smul.addr %s217, 4
      %s219 = scalar_lea.vmem %s0, %s218
      %p220 = scmp.lt.s32.totalorder %s16, 1
      %s221 = scalar_select %p220, %s16, 1
      %s222 = smul.addr %s221, 3
      %s223 = smul.addr %s222, 4
      %s224 = scalar_lea.vmem %s5, %s223
      %v226 = vld [vmem:[%s219] sm:$0xf]
      %v227 = vld [vmem:[%s219 + $0x4] sm:$0xf]
      %v228 = vld [vmem:[%s1] sm:$0xf]
      %v229 = vld [vmem:[%s1 + $0x4] sm:$0xf]
      %v230 = vld [vmem:[%s1 + $0x8] sm:$0xf]
      %v231 = vld [vmem:[%s1 + $0xc] sm:$0xf]
      %v232 = vld [vmem:[%s1 + $0x10] sm:$0xf]
      %v233 = vld [vmem:[%s1 + $0x14] sm:$0xf]
      %v234 = vld [vmem:[%s2] sm:$0x1]
      %v236 = vperm.slane %v234, 0
      %v240 = vunpack.c.l.b16 %v226
      %v241 = vunpack.c.l.b16 %v227
      %v242 = vpack.c.b16 %v241, %v240
      %v249 = vunpack.c.l.b16 %v228
      %v250 = vunpack.c.l.b16 %v229
      %v251 = vunpack.c.l.b16 %v230
      %v252 = vunpack.c.l.b16 %v231
      %v253 = vunpack.c.l.b16 %v232
      %v254 = vunpack.c.l.b16 %v233
      %v255 = vpack.c.b16 %v250, %v249
      %v256 = vpack.c.b16 %v252, %v251
      %v257 = vpack.c.b16 %v254, %v253
      %vm261 = vcmask 392192
      %v263 = vsel %vm261, %v242, 0
      %265 = vmatpush.bf16.msra.mxu0 0
      %266 = vmatpush.bf16.msra.mxu0 0
      %267 = vmatpush.bf16.msra.mxu0 0
      %268 = vmatpush.bf16.msra.mxu0 0
      %269 = vmatpush.bf16.msra.mxu0 0
      %270 = vmatpush.bf16.msra.mxu0 %v257
      %271 = vmatpush.bf16.msra.mxu0 %v256
      %272 = vmatpush.bf16.msra.mxu0 %v255
      %273 = vmatmul.bf16.gmra.mxu0 %v263
      %v274 = vpop.f32.mrf.mxu0
      %v275 = vadd.f32 %v236, %v274
      %v276 = vpop.f32.mrf.mxu0
      %v277 = vadd.f32 %v236, %v276
      %278 = vdwg.mxu0
      %v279 = vld [vmem:[%s3] sm:$0xff]
      %v280 = vld [vmem:[%s3 + $0x8] sm:$0xff]
      %v281 = vadd.f32 %v275, %v279
      %v282 = vadd.f32 %v277, %v280
      %v283 = vpack.c.bf16 %v281, %v281
      %v284 = vpack.c.bf16 %v282, %v282
      %vm285 = vcmask 257024
      %286 = vst.msk [vmem:[%s224] sm:$0xf] %vm285, %v283
      %287 = vst.msk [vmem:[%s224 + $0x4] sm:$0xf] %vm285, %v284
      %v288 = vld [vmem:[%s4] sm:$0x1]
      %v289 = vpack.c.bf16 %v288, %v288
      %vm290 = vcmask 253952
      %vm291 = vsmask.f32 256
      %vm292 = vmand %vm290, %vm291
      %v293 = vld [vmem:[%s224 + $0x8] sm:$0x1]
      %v294 = vsel %vm292, %v289, %v293
      %295 = vst [vmem:[%s224 + $0x8] sm:$0x1] %v294
      %p296 = scmp.lt.s32.totalorder %s16, 1
      %s297 = scalar_select %p296, %s16, 1
      %s298 = smul.addr %s297, 3
      %s299 = smul.addr %s298, 4
      %s300 = scalar_lea.vmem %s5, %s299
      // Predicated region
      $region41: #{vit_forward.10} parent=39 // pred_check
        %p301 = pneg %p144
      $region42: #{vit_forward.10} parent=39 // pred_check_branch
        %303 = sbr.rel (%p301) target = $region44
      $region43: #{vit_forward.10} parent=39 // pred_region
        _
      $region44: #{vit_forward.10} parent=39 // pred_fallthru
        _
    $region40: #{vit_forward.10} parent=5 // pred_fallthru
      _
    %p304 = scmp.le.s32.totalorder 2, %s11
    // Predicated region
    $region45: #{vit_forward.10} parent=5 // pred_check
      %p305 = pneg %p304
    $region46: #{vit_forward.10} parent=5 // pred_check_branch
      %307 = sbr.rel (%p305) target = $region48
    $region47: #{vit_forward.10} parent=5 // pred_region
      %s308 = ssub.s32 %s11, 2
      // Predicated region
      $region49: #{vit_forward.10} parent=47 // pred_check
        %p309 = pneg %p150
      $region50: #{vit_forward.10} parent=47 // pred_check_branch
        %311 = sbr.rel (%p309) target = $region52
      $region51: #{vit_forward.10} parent=47 // pred_region
        %p312 = scmp.lt.s32.totalorder %s17, 1
        %s313 = scalar_select %p312, %s17, 1
        %s314 = smul.addr %s313, 3
        %s315 = smul.addr %s314, 4
        %s316 = scalar_lea.vmem %s5, %s315
      $region52: #{vit_forward.10} parent=47 // pred_fallthru
        _
    $region48: #{vit_forward.10} parent=5 // pred_fallthru
      _
  $region6: #{vit_forward.10} parent=0 // loop_footer
    %s15 = sadd.s32 1, %s11
  $region7: #{vit_forward.10} parent=0 // loop_footer_branch
    %10 = sbr.rel target = $region3
  $region8: #{vit_forward.10} parent=0 // loop_exit
    _

// kernel: vit_forward.11
$region0: #{vit_forward.11}
  #allocation0 [shape = 'u32[]', space=smem, size = 0x4, offset = 0x4, fixed_abs, tag = 'smem constant byte address 0x4 - core index']
  #allocation1 [shape = 'u32[72,128]{1,0:T(1,128)}', space=vmem, size = 0x9000, scoped, tag = 'internal scratch']
  %s0 = inlined_call_operand.vmem [shape: bf16[34,32], index: 0, kind: input, shape index: {}]
  %s1 = inlined_call_operand.vmem [shape: f32[1,32], index: 1, kind: input, shape index: {}]
  %s2 = inlined_call_operand.vmem [shape: f32[1,32], index: 2, kind: input, shape index: {}]
  %s3 = inlined_call_operand.vmem [shape: bf16[32,96], index: 3, kind: input, shape index: {}]
  %s4 = inlined_call_operand.vmem [shape: f32[1,96], index: 4, kind: input, shape index: {}]
  %s5 = inlined_call_operand.vmem [shape: bf16[34,96], index: 5, kind: output, shape index: {}]
  %s6 = sld [smem:[#allocation0]]
  $region30: #{vit_forward.11} parent=0
    _
  %s8 = ssub.s32 1, %s6
  %s9 = scalar_select 0, %s8, %s6
  // Predicated region
  $region2: #{vit_forward.11} parent=0 // pred_check
    _
  $region3: #{vit_forward.11} parent=0 // pred_check_branch
    %11 = sbr.rel (0) target = $region5
  $region4: #{vit_forward.11} parent=0 // pred_region
    _
  $region5: #{vit_forward.11} parent=0 // pred_fallthru
    _
  // Predicated region
  $region6: #{vit_forward.11} parent=0 // pred_check
    _
  $region7: #{vit_forward.11} parent=0 // pred_check_branch
    %13 = sbr.rel (0) target = $region9
  $region8: #{vit_forward.11} parent=0 // pred_region
    _
  $region9: #{vit_forward.11} parent=0 // pred_fallthru
    _
  // Predicated region
  $region10: #{vit_forward.11} parent=0 // pred_check
    _
  $region11: #{vit_forward.11} parent=0 // pred_check_branch
    %15 = sbr.rel (0) target = $region13
  $region12: #{vit_forward.11} parent=0 // pred_region
    _
  $region13: #{vit_forward.11} parent=0 // pred_fallthru
    _
  // Predicated region
  $region14: #{vit_forward.11} parent=0 // pred_check
    _
  $region15: #{vit_forward.11} parent=0 // pred_check_branch
    %17 = sbr.rel (0) target = $region17
  $region16: #{vit_forward.11} parent=0 // pred_region
    _
  $region17: #{vit_forward.11} parent=0 // pred_fallthru
    _
  // Predicated region
  $region18: #{vit_forward.11} parent=0 // pred_check
    _
  $region19: #{vit_forward.11} parent=0 // pred_check_branch
    %19 = sbr.rel (0) target = $region21
  $region20: #{vit_forward.11} parent=0 // pred_region
    _
  $region21: #{vit_forward.11} parent=0 // pred_fallthru
    _
  %v21 = vld [vmem:[%s0] sm:$0xf]
  %v22 = vld [vmem:[%s0 + $0x4] sm:$0xf]
  %v23 = vld [vmem:[%s0 + $0x8] sm:$0xf]
  %v24 = vld [vmem:[%s0 + $0xc] sm:$0xf]
  %v25 = vld [vmem:[%s0 + $0x10] sm:$0x1]
  %v26 = vunpack.c.l.bf16 %v21
  %v27 = vunpack.c.l.bf16 %v22
  %v28 = vunpack.c.l.bf16 %v23
  %v29 = vunpack.c.l.bf16 %v24
  %v30 = vunpack.c.l.bf16 %v25
  %vm31 = vcmask 261120
  %v32 = vsel %vm31, %v26, 0.0
  %33 = vadd.xlane.f32.xlu0 %v32
  %v34 = vpop.xlane.xlu0 %33
  %v35 = vsel %vm31, %v27, 0.0
  %36 = vadd.xlane.f32.xlu0 %v35
  %v37 = vpop.xlane.xlu0 %36
  %v38 = vsel %vm31, %v28, 0.0
  %39 = vadd.xlane.f32.xlu0 %v38
  %v40 = vpop.xlane.xlu0 %39
  %v41 = vsel %vm31, %v29, 0.0
  %42 = vadd.xlane.f32.xlu0 %v41
  %v43 = vpop.xlane.xlu0 %42
  %vm44 = vcmask 254976
  %v45 = vsel %vm44, %v30, 0.0
  %46 = vadd.xlane.f32.xlu0 %v45
  %v47 = vpop.xlane.xlu0 %46
  %v48 = vrcp.pop 32.0
  %v49 = vmul.f32 32.0, %v48
  %v50 = vsub.f32 1.0, %v49
  %v51 = vmul.f32 %v48, %v50
  %v52 = vadd.f32 %v48, %v51
  %vm53 = vweird.f32 %v48
  %v54 = vsel %vm53, %v48, %v52
  %v55 = vmul.f32 %v34, %v54
  %v56 = vmul.f32 %v37, %v54
  %v57 = vmul.f32 %v40, %v54
  %v58 = vmul.f32 %v43, %v54
  %v59 = vmul.f32 %v47, %v54
  %v60 = vsub.f32 %v26, %v55
  %v61 = vsub.f32 %v27, %v56
  %v62 = vsub.f32 %v28, %v57
  %v63 = vsub.f32 %v29, %v58
  %v64 = vsub.f32 %v30, %v59
  %v65 = vmul.f32 %v60, %v60
  %v66 = vmul.f32 %v61, %v61
  %v67 = vmul.f32 %v62, %v62
  %v68 = vmul.f32 %v63, %v63
  %v69 = vmul.f32 %v64, %v64
  %v70 = vsel %vm31, %v65, 0.0
  %71 = vadd.xlane.f32.xlu0 %v70
  %v72 = vpop.xlane.xlu0 %71
  %v73 = vsel %vm31, %v66, 0.0
  %74 = vadd.xlane.f32.xlu0 %v73
  %v75 = vpop.xlane.xlu0 %74
  %v76 = vsel %vm31, %v67, 0.0
  %77 = vadd.xlane.f32.xlu0 %v76
  %v78 = vpop.xlane.xlu0 %77
  %v79 = vsel %vm31, %v68, 0.0
  %80 = vadd.xlane.f32.xlu0 %v79
  %v81 = vpop.xlane.xlu0 %80
  %v82 = vsel %vm44, %v69, 0.0
  %83 = vadd.xlane.f32.xlu0 %v82
  %v84 = vpop.xlane.xlu0 %83
  %v85 = vmul.f32 %v72, %v54
  %v86 = vmul.f32 %v75, %v54
  %v87 = vmul.f32 %v78, %v54
  %v88 = vmul.f32 %v81, %v54
  %v89 = vmul.f32 %v84, %v54
  %v90 = vadd.f32 %v85, 1e-05
  %v91 = vadd.f32 %v86, 1e-05
  %v92 = vadd.f32 %v87, 1e-05
  %v93 = vadd.f32 %v88, 1e-05
  %v94 = vadd.f32 %v89, 1e-05
  %v95 = vrsqrt.pop %v90
  %v96 = vmul.f32 %v95, %v90
  %v97 = vmul.f32 %v96, %v95
  %v98 = vmul.f32 0.5, %v97
  %v99 = vsub.f32 1.5, %v98
  %v100 = vmul.f32 %v95, %v99
  %vm101 = vweird.f32 %v90
  %vm102 = vweird.f32 %v95
  %vm103 = vmor %vm101, %vm102
  %v104 = vsel %vm103, %v95, %v100
  %v105 = vrsqrt.pop %v91
  %v106 = vmul.f32 %v105, %v91
  %v107 = vmul.f32 %v106, %v105
  %v108 = vmul.f32 0.5, %v107
  %v109 = vsub.f32 1.5, %v108
  %v110 = vmul.f32 %v105, %v109
  %vm111 = vweird.f32 %v91
  %vm112 = vweird.f32 %v105
  %vm113 = vmor %vm111, %vm112
  %v114 = vsel %vm113, %v105, %v110
  %v115 = vrsqrt.pop %v92
  %v116 = vmul.f32 %v115, %v92
  %v117 = vmul.f32 %v116, %v115
  %v118 = vmul.f32 0.5, %v117
  %v119 = vsub.f32 1.5, %v118
  %v120 = vmul.f32 %v115, %v119
  %vm121 = vweird.f32 %v92
  %vm122 = vweird.f32 %v115
  %vm123 = vmor %vm121, %vm122
  %v124 = vsel %vm123, %v115, %v120
  %v125 = vrsqrt.pop %v93
  %v126 = vmul.f32 %v125, %v93
  %v127 = vmul.f32 %v126, %v125
  %v128 = vmul.f32 0.5, %v127
  %v129 = vsub.f32 1.5, %v128
  %v130 = vmul.f32 %v125, %v129
  %vm131 = vweird.f32 %v93
  %vm132 = vweird.f32 %v125
  %vm133 = vmor %vm131, %vm132
  %v134 = vsel %vm133, %v125, %v130
  %v135 = vrsqrt.pop %v94
  %v136 = vmul.f32 %v135, %v94
  %v137 = vmul.f32 %v136, %v135
  %v138 = vmul.f32 0.5, %v137
  %v139 = vsub.f32 1.5, %v138
  %v140 = vmul.f32 %v135, %v139
  %vm141 = vweird.f32 %v94
  %vm142 = vweird.f32 %v135
  %vm143 = vmor %vm141, %vm142
  %v144 = vsel %vm143, %v135, %v140
  %v145 = vmul.f32 %v60, %v104
  %v146 = vmul.f32 %v61, %v114
  %v147 = vmul.f32 %v62, %v124
  %v148 = vmul.f32 %v63, %v134
  %v149 = vmul.f32 %v64, %v144
  %v150 = vld [vmem:[%s1] sm:$0x1]
  %v152 = vperm.slane %v150, 0
  %v154 = vmul.f32 %v145, %v152
  %v155 = vmul.f32 %v146, %v152
  %v156 = vmul.f32 %v147, %v152
  %v157 = vmul.f32 %v148, %v152
  %v158 = vmul.f32 %v149, %v152
  %v159 = vld [vmem:[%s2] sm:$0x1]
  %v161 = vperm.slane %v159, 0
  %v163 = vadd.f32 %v154, %v161
  %v164 = vadd.f32 %v155, %v161
  %v165 = vadd.f32 %v156, %v161
  %v166 = vadd.f32 %v157, %v161
  %v167 = vadd.f32 %v158, %v161
  %v168 = vpack.c.bf16 %v164, %v163
  %v169 = vpack.c.bf16 %v166, %v165
  %v170 = vpack.c.bf16 %v167, %v167
  %v171 = vld [vmem:[%s3] sm:$0xf]
  %v172 = vld [vmem:[%s3 + $0x4] sm:$0xf]
  %v173 = vld [vmem:[%s3 + $0x8] sm:$0xf]
  %v174 = vld [vmem:[%s3 + $0xc] sm:$0xf]
  %v175 = vld [vmem:[%s4] sm:$0x1]
  %v177 = vperm.slane %v175, 0
  %v183 = vunpack.c.l.b16 %v171
  %v184 = vunpack.c.l.b16 %v172
  %v185 = vunpack.c.l.b16 %v173
  %v186 = vunpack.c.l.b16 %v174
  %v187 = vpack.c.b16 %v184, %v183
  %v188 = vpack.c.b16 %v186, %v185
  %v192 = vsel %vm31, %v168, 0
  %v195 = vsel %vm31, %v169, 0
  %v198 = vsel %vm31, %v170, 0
  %200 = vmatpush.bf16.msra.mxu0 0
  %201 = vmatpush.bf16.msra.mxu0 0
  %202 = vmatpush.bf16.msra.mxu0 0
  %203 = vmatpush.bf16.msra.mxu0 0
  %204 = vmatpush.bf16.msra.mxu0 0
  %205 = vmatpush.bf16.msra.mxu0 0
  %206 = vmatpush.bf16.msra.mxu0 %v188
  %207 = vmatpush.bf16.msra.mxu0 %v187
  %208 = vmatmul.bf16.gmra.mxu0 %v192
  %v209 = vpop.f32.mrf.mxu0
  %v210 = vadd.f32 %v177, %v209
  %v211 = vpop.f32.mrf.mxu0
  %v212 = vadd.f32 %v177, %v211
  %213 = vmatmul.bf16.gmra.mxu0 %v195
  %v214 = vpop.f32.mrf.mxu0
  %v215 = vadd.f32 %v177, %v214
  %v216 = vpop.f32.mrf.mxu0
  %v217 = vadd.f32 %v177, %v216
  %218 = vmatmul.bf16.gmra.mxu0 %v198
  %v219 = vpop.f32.mrf.mxu0
  %v220 = vadd.f32 %v177, %v219
  %v221 = vpop.f32.mrf.mxu0
  %222 = vdwg.mxu0
  %v223 = vpack.c.bf16 %v210, %v210
  %v224 = vpack.c.bf16 %v212, %v212
  %v225 = vpack.c.bf16 %v215, %v215
  %v226 = vpack.c.bf16 %v217, %v217
  %v227 = vpack.c.bf16 %v220, %v220
  %vm228 = vcmask 781312
  %229 = vst.msk [vmem:[%s5] sm:$0xf] %vm228, %v223
  %230 = vst.msk [vmem:[%s5 + $0x4] sm:$0xf] %vm228, %v224
  %231 = vst.msk [vmem:[%s5 + $0x8] sm:$0xf] %vm228, %v225
  %232 = vst.msk [vmem:[%s5 + $0xc] sm:$0xf] %vm228, %v226
  %vm233 = vcmask 778240
  %234 = vst.msk [vmem:[%s5 + $0x10] sm:$0x1] %vm233, %v227
  // Predicated region
  $region22: #{vit_forward.11} parent=0 // pred_check
    _
  $region23: #{vit_forward.11} parent=0 // pred_check_branch
    %236 = sbr.rel (0) target = $region25
  $region24: #{vit_forward.11} parent=0 // pred_region
    _
  $region25: #{vit_forward.11} parent=0 // pred_fallthru
    _
  // Predicated region
  $region26: #{vit_forward.11} parent=0 // pred_check
    _
  $region27: #{vit_forward.11} parent=0 // pred_check_branch
    %238 = sbr.rel (0) target = $region29
  $region28: #{vit_forward.11} parent=0 // pred_region
    _
  $region29: #{vit_forward.11} parent=0 // pred_fallthru
    _

// kernel: vit_forward.12
$region0: #{vit_forward.12}
  #allocation0 [shape = 'u32[]', space=smem, size = 0x4, offset = 0x4, fixed_abs, tag = 'smem constant byte address 0x4 - core index']
  #allocation1 [shape = 'u32[72,128]{1,0:T(1,128)}', space=vmem, size = 0x9000, scoped, tag = 'internal scratch']
  %s0 = inlined_call_operand.vmem [shape: bf16[2,17,96], index: 0, kind: input, shape index: {}]
  %s1 = inlined_call_operand.vmem [shape: bf16[32,32], index: 1, kind: input, shape index: {}]
  %s2 = inlined_call_operand.vmem [shape: f32[1,32], index: 2, kind: input, shape index: {}]
  %s3 = inlined_call_operand.vmem [shape: bf16[2,17,32], index: 3, kind: input, shape index: {}]
  %s4 = inlined_call_operand.vmem [shape: bf16[2,17,32], index: 4, kind: output, shape index: {}]
  %s5 = sld [smem:[#allocation0]]
  $region49: #{vit_forward.12} parent=0
    _
  %s7 = ssub.s32 1, %s5
  %s8 = scalar_select 0, %s7, %s5
  loop: start=0, step=1, limit=4
  $region2: #{vit_forward.12} parent=0 // loop_pre_header
    _
  $region3: #{vit_forward.12} parent=0 // loop_header
    %s10 = sphi 0, %s14
    %p11 = scmp.ge.s32.totalorder %s10, 4
    %s20 = sphi 0, %s22
    %s23 = sphi 0, %s20
    %s24 = sphi 0, %s23
    %s40 = sphi 0, %s24
    %s44 = sphi 0, %s44
    %s46 = sphi 0, %s44
    %s47 = sphi 0, %s46
    %s61 = sphi 0, %s47
    %s65 = sphi 0, %s65
    %s67 = sphi 0, %s65
    %s68 = sphi 0, %s67
    %s82 = sphi 0, %s68
    %s88 = sphi 0, %s90
    %s91 = sphi 0, %s88
    %s92 = sphi 0, %s91
    %s108 = sphi 0, %s92
    %s114 = sphi 0, %s116
    %s117 = sphi 0, %s114
    %s118 = sphi 0, %s117
    %s134 = sphi 0, %s118
  $region4: #{vit_forward.12} parent=0 // loop_header_branch
    %13 = sbr.rel (%p11) target = $region8
  $region5: #{vit_forward.12} parent=0 // loop_body
    %s15 = ssub.s32 %s10, 1
    %s16 = ssub.s32 %s10, 2
    %s17 = sadd.s32 %s10, 1
    %s18 = ssub.s32 %s10, %s17
    %p19 = scmp.eq.s32.totalorder %s18, 0
    %s21 = sadd.s32 %s20, 1
    %s22 = scalar_select %p19, %s20, %s21
    %p25 = pneg %p19
    %p26 = scmp.eq.s32.totalorder %s10, 1
    %p27 = por %p25, %p26
    %p28 = scmp.ne.s32.totalorder %s20, %s23
    %p29 = scmp.eq.s32.totalorder %s10, 0
    %p30 = por %p28, %p29
    %p31 = scmp.ne.s32.totalorder %s20, %s23
    %p32 = scmp.eq.s32.totalorder %s15, 1
    %p33 = por %p31, %p32
    %p34 = scmp.ne.s32.totalorder %s23, %s24
    %p35 = scmp.eq.s32.totalorder %s15, 0
    %p36 = por %p34, %p35
    %p37 = scmp.ne.s32.totalorder %s23, %s24
    %p38 = scmp.eq.s32.totalorder %s16, 1
    %p39 = por %p37, %p38
    %p41 = scmp.ne.s32.totalorder %s24, %s40
    %p42 = scmp.eq.s32.totalorder %s16, 0
    %p43 = por %p41, %p42
    %s45 = sadd.s32 %s44, 1
    %p48 = scmp.eq.s32.totalorder %s10, 1
    %p49 = scmp.ne.s32.totalorder %s44, %s46
    %p50 = scmp.eq.s32.totalorder %s10, 0
    %p51 = por %p49, %p50
    %p52 = scmp.ne.s32.totalorder %s44, %s46
    %p53 = scmp.eq.s32.totalorder %s15, 1
    %p54 = por %p52, %p53
    %p55 = scmp.ne.s32.totalorder %s46, %s47
    %p56 = scmp.eq.s32.totalorder %s15, 0
    %p57 = por %p55, %p56
    %p58 = scmp.ne.s32.totalorder %s46, %s47
    %p59 = scmp.eq.s32.totalorder %s16, 1
    %p60 = por %p58, %p59
    %p62 = scmp.ne.s32.totalorder %s47, %s61
    %p63 = scmp.eq.s32.totalorder %s16, 0
    %p64 = por %p62, %p63
    %s66 = sadd.s32 %s65, 1
    %p69 = scmp.eq.s32.totalorder %s10, 1
    %p70 = scmp.ne.s32.totalorder %s65, %s67
    %p71 = scmp.eq.s32.totalorder %s10, 0
    %p72 = por %p70, %p71
    %p73 = scmp.ne.s32.totalorder %s65, %s67
    %p74 = scmp.eq.s32.totalorder %s15, 1
    %p75 = por %p73, %p74
    %p76 = scmp.ne.s32.totalorder %s67, %s68
    %p77 = scmp.eq.s32.totalorder %s15, 0
    %p78 = por %p76, %p77
    %p79 = scmp.ne.s32.totalorder %s67, %s68
    %p80 = scmp.eq.s32.totalorder %s16, 1
    %p81 = por %p79, %p80
    %p83 = scmp.ne.s32.totalorder %s68, %s82
    %p84 = scmp.eq.s32.totalorder %s16, 0
    %p85 = por %p83, %p84
    %s86 = ssub.s32 %s10, %s17
    %p87 = scmp.eq.s32.totalorder %s86, 0
    %s89 = sadd.s32 %s88, 1
    %s90 = scalar_select %p87, %s88, %s89
    %p93 = pneg %p87
    %p94 = scmp.eq.s32.totalorder %s10, 1
    %p95 = por %p93, %p94
    %p96 = scmp.ne.s32.totalorder %s88, %s91
    %p97 = scmp.eq.s32.totalorder %s10, 0
    %p98 = por %p96, %p97
    %p99 = scmp.ne.s32.totalorder %s88, %s91
    %p100 = scmp.eq.s32.totalorder %s15, 1
    %p101 = por %p99, %p100
    %p102 = scmp.ne.s32.totalorder %s91, %s92
    %p103 = scmp.eq.s32.totalorder %s15, 0
    %p104 = por %p102, %p103
    %p105 = scmp.ne.s32.totalorder %s91, %s92
    %p106 = scmp.eq.s32.totalorder %s16, 1
    %p107 = por %p105, %p106
    %p109 = scmp.ne.s32.totalorder %s92, %s108
    %p110 = scmp.eq.s32.totalorder %s16, 0
    %p111 = por %p109, %p110
    %s112 = ssub.s32 %s10, %s17
    %p113 = scmp.eq.s32.totalorder %s112, 0
    %s115 = sadd.s32 %s114, 1
    %s116 = scalar_select %p113, %s114, %s115
    %p119 = pneg %p113
    %p120 = scmp.eq.s32.totalorder %s10, 1
    %p121 = por %p119, %p120
    %p122 = scmp.ne.s32.totalorder %s114, %s117
    %p123 = scmp.eq.s32.totalorder %s10, 0
    %p124 = por %p122, %p123
    %p125 = scmp.ne.s32.totalorder %s114, %s117
    %p126 = scmp.eq.s32.totalorder %s15, 1
    %p127 = por %p125, %p126
    %p128 = scmp.ne.s32.totalorder %s117, %s118
    %p129 = scmp.eq.s32.totalorder %s15, 0
    %p130 = por %p128, %p129
    %p131 = scmp.ne.s32.totalorder %s117, %s118
    %p132 = scmp.eq.s32.totalorder %s16, 1
    %p133 = por %p131, %p132
    %p135 = scmp.ne.s32.totalorder %s118, %s134
    %p136 = scmp.eq.s32.totalorder %s16, 0
    %p137 = por %p135, %p136
    %p138 = scmp.le.s32.totalorder 1, %s10
    %p139 = scmp.lt.s32.totalorder %s10, 3
    %p140 = pnand %p138, %p139
    %p141 = pneg %p140
    // Predicated region
    $region9: #{vit_forward.12} parent=5 // pred_check
      _
    $region10: #{vit_forward.12} parent=5 // pred_check_branch
      %143 = sbr.rel (%p140) target = $region12
    $region11: #{vit_forward.12} parent=5 // pred_region
      %s144 = ssub.s32 %s10, 1
      // Predicated region
      $region13: #{vit_forward.12} parent=11 // pred_check
        %p145 = pneg %p57
      $region14: #{vit_forward.12} parent=11 // pred_check_branch
        %147 = sbr.rel (%p145) target = $region16
      $region15: #{vit_forward.12} parent=11 // pred_region
        _
      $region16: #{vit_forward.12} parent=11 // pred_fallthru
        _
      // Predicated region
      $region17: #{vit_forward.12} parent=11 // pred_check
        %p148 = pneg %p78
      $region18: #{vit_forward.12} parent=11 // pred_check_branch
        %150 = sbr.rel (%p148) target = $region20
      $region19: #{vit_forward.12} parent=11 // pred_region
        _
      $region20: #{vit_forward.12} parent=11 // pred_fallthru
        _
    $region12: #{vit_forward.12} parent=5 // pred_fallthru
      _
    %p151 = scmp.lt.s32.totalorder %s10, 2
    // Predicated region
    $region21: #{vit_forward.12} parent=5 // pred_check
      %p152 = pneg %p151
    $region22: #{vit_forward.12} parent=5 // pred_check_branch
      %154 = sbr.rel (%p152) target = $region24
    $region23: #{vit_forward.12} parent=5 // pred_region
      // Predicated region
      $region25: #{vit_forward.12} parent=23 // pred_check
        %p155 = pneg %p30
      $region26: #{vit_forward.12} parent=23 // pred_check_branch
        %157 = sbr.rel (%p155) target = $region28
      $region27: #{vit_forward.12} parent=23 // pred_region
        %p158 = scmp.lt.s32.totalorder %s10, 1
        %s159 = scalar_select %p158, %s10, 1
        %s160 = smul.addr %s159, 3
        %s161 = smul.addr %s160, 4
        %s162 = scalar_lea.vmem %s0, %s161
      $region28: #{vit_forward.12} parent=23 // pred_fallthru
        _
      // Predicated region
      $region29: #{vit_forward.12} parent=23 // pred_check
        %p163 = pneg %p98
      $region30: #{vit_forward.12} parent=23 // pred_check_branch
        %165 = sbr.rel (%p163) target = $region32
      $region31: #{vit_forward.12} parent=23 // pred_region
        %p166 = scmp.lt.s32.totalorder %s10, 1
        %s167 = scalar_select %p166, %s10, 1
        %s168 = smul.addr %s167, 3
        %s169 = smul.addr %s168, 4
        %s170 = scalar_lea.vmem %s3, %s169
      $region32: #{vit_forward.12} parent=23 // pred_fallthru
        _
    $region24: #{vit_forward.12} parent=5 // pred_fallthru
      _
    %p171 = scmp.le.s32.totalorder 1, %s10
    %p172 = scmp.lt.s32.totalorder %s10, 3
    %p173 = pnand %p171, %p172
    %p174 = pneg %p173
    // Predicated region
    $region33: #{vit_forward.12} parent=5 // pred_check
      _
    $region34: #{vit_forward.12} parent=5 // pred_check_branch
      %176 = sbr.rel (%p173) target = $region36
    $region35: #{vit_forward.12} parent=5 // pred_region
      %s177 = ssub.s32 %s10, 1
      %p178 = scmp.lt.s32.totalorder %s15, 1
      %s179 = scalar_select %p178, %s15, 1
      %s180 = smul.addr %s179, 3
      %s181 = smul.addr %s180, 4
      %s182 = scalar_lea.vmem %s0, %s181
      %p183 = pneg %p36
      %p184 = pneg %p33
      %p185 = pneg %p57
      %p186 = pneg %p54
      %p187 = pneg %p78
      %p188 = pneg %p75
      %p189 = scmp.lt.s32.totalorder %s15, 1
      %s190 = scalar_select %p189, %s15, 1
      %s191 = smul.addr %s190, 3
      %s192 = smul.addr %s191, 4
      %s193 = scalar_lea.vmem %s3, %s192
      %p194 = pneg %p104
      %p195 = pneg %p101
      %p196 = pneg %p130
      %p197 = pneg %p127
      %p198 = scmp.lt.s32.totalorder %s15, 1
      %s199 = scalar_select %p198, %s15, 1
      %s200 = smul.addr %s199, 3
      %s201 = smul.addr %s200, 4
      %s202 = scalar_lea.vmem %s4, %s201
      %p203 = scmp.lt.s32.totalorder %s15, 1
      %s204 = scalar_select %p203, %s15, 1
      %s205 = smul.addr %s204, 3
      %s206 = smul.addr %s205, 4
      %s207 = scalar_lea.vmem %s0, %s206
      %p208 = scmp.lt.s32.totalorder %s15, 1
      %s209 = scalar_select %p208, %s15, 1
      %s210 = smul.addr %s209, 3
      %s211 = smul.addr %s210, 4
      %s212 = scalar_lea.vmem %s3, %s211
      %p213 = scmp.lt.s32.totalorder %s15, 1
      %s214 = scalar_select %p213, %s15, 1
      %s215 = smul.addr %s214, 3
      %s216 = smul.addr %s215, 4
      %s217 = scalar_lea.vmem %s4, %s216
      %v219 = vld [vmem:[%s2] sm:$0x1]
      %v220 = vld [vmem:[%s212] sm:$0xf]
      %v221 = vld [vmem:[%s212 + $0x4] sm:$0xf]
      %v222 = vld [vmem:[%s212 + $0x8] sm:$0x1]
      %v223 = vunpack.c.l.bf16 %v220
      %v224 = vunpack.c.l.bf16 %v221
      %v225 = vunpack.c.l.bf16 %v222
      %v227 = vperm.slane %v219, 0
      %v229 = vadd.f32 %v227, %v223
      %v230 = vadd.f32 %v227, %v224
      %v231 = vadd.f32 %v227, %v225
      %v232 = vld [vmem:[%s207] sm:$0xf]
      %v233 = vld [vmem:[%s207 + $0x4] sm:$0xf]
      %v234 = vld [vmem:[%s207 + $0x8] sm:$0x1]
      %v238 = vunpack.c.l.b16 %v232
      %v239 = vunpack.c.l.b16 %v233
      %v240 = vunpack.c.l.b16 %v234
      %v241 = vpack.c.b16 %v239, %v238
      %v242 = vpack.c.b16 %v240, %v240
      %243 = vrot.lane.b32.xlu0 %v241, 96
      %v244 = vpop.permute.xlu0 %243
      %245 = vrot.lane.b32.xlu0 %v242, 96
      %v246 = vpop.permute.xlu0 %245
      %vm247 = vcmask 64512
      %v249 = vsel %vm247, %v241, 0
      %v252 = vsel %vm247, %v242, 0
      %v255 = vsel %vm247, %v244, 0
      %v258 = vsel %vm247, %v246, 0
      %260 = vmatpush.bf16.xpose.msra.mxu0 0
      %261 = vmatpush.bf16.xpose.msra.mxu0 0
      %262 = vmatpush.bf16.xpose.msra.mxu0 0
      %263 = vmatpush.bf16.xpose.msra.mxu0 0
      %264 = vmatpush.bf16.xpose.msra.mxu0 0
      %265 = vmatpush.bf16.xpose.msra.mxu0 0
      %266 = vmatpush.bf16.xpose.msra.mxu0 %v258
      %267 = vmatpush.bf16.xpose.msra.mxu0 %v255
      %268 = vmatmul.bf16.gmra.mxu0 %v249
      %v269 = vpop.f32.mrf.mxu0
      %v270 = vadd.f32 0.0, %v269
      %v271 = vpop.f32.mrf.mxu0
      %v272 = vadd.f32 0.0, %v271
      %273 = vmatmul.bf16.gmra.mxu0 %v252
      %v274 = vpop.f32.mrf.mxu0
      %v275 = vadd.f32 0.0, %v274
      %v276 = vpop.f32.mrf.mxu0
      %277 = vdwg.mxu0
      %v278 = vmul.f32 %v270, 0.35355338
      %v279 = vmul.f32 %v272, 0.35355338
      %v280 = vmul.f32 %v275, 0.35355338
      %vm281 = vcmask 138240
      %v282 = vsel %vm281, %v278, -inf
      %283 = vmax.xlane.f32.xlu0 %v282
      %v284 = vpop.xlane.xlu0 %283
      %v285 = vsel %vm281, %v279, -inf
      %286 = vmax.xlane.f32.xlu0 %v285
      %v287 = vpop.xlane.xlu0 %286
      %vm288 = vcmask 131072
      %v289 = vsel %vm288, %v280, -inf
      %290 = vmax.xlane.f32.xlu0 %v289
      %v291 = vpop.xlane.xlu0 %290
      %v292 = vsub.f32 %v278, %v284
      %v293 = vsub.f32 %v279, %v287
      %v294 = vsub.f32 %v280, %v291
      %v295 = vmul.f32 %v292, 1.442695
      %v296 = vpow.pop %v295
      %v297 = vmul.f32 %v293, 1.442695
      %v298 = vpow.pop %v297
      %v299 = vmul.f32 %v294, 1.442695
      %v300 = vpow.pop %v299
      %v301 = vsel %vm281, %v296, 0.0
      %302 = vadd.xlane.f32.xlu0 %v301
      %v303 = vpop.xlane.xlu0 %302
      %v304 = vsel %vm281, %v298, 0.0
      %305 = vadd.xlane.f32.xlu0 %v304
      %v306 = vpop.xlane.xlu0 %305
      %v307 = vsel %vm288, %v300, 0.0
      %308 = vadd.xlane.f32.xlu0 %v307
      %v309 = vpop.xlane.xlu0 %308
      %v310 = vrcp.pop %v303
      %v311 = vrcp.pop %v306
      %v312 = vrcp.pop %v309
      %v313 = vmul.f32 %v296, %v310
      %v314 = vmul.f32 %v298, %v311
      %v315 = vmul.f32 %v300, %v312
      %v316 = vpack.c.bf16 %v314, %v313
      %v317 = vpack.c.bf16 %v315, %v315
      %318 = vrot.lane.b32.xlu0 %v241, 64
      %v319 = vpop.permute.xlu0 %318
      %320 = vrot.lane.b32.xlu0 %v242, 64
      %v321 = vpop.permute.xlu0 %320
      %v324 = vsel %vm281, %v316, 0
      %v327 = vsel %vm281, %v317, 0
      %vm329 = vcmask 1040384
      %v330 = vsel 0, 4294967295, 65535
      %v331 = vsel %vm329, %v330, 0
      %v333 = vand.u32 %v321, %v331
      %335 = vmatpush.bf16.msra.mxu0 0
      %336 = vmatpush.bf16.msra.mxu0 0
      %337 = vmatpush.bf16.msra.mxu0 0
      %338 = vmatpush.bf16.msra.mxu0 0
      %339 = vmatpush.bf16.msra.mxu0 0
      %340 = vmatpush.bf16.msra.mxu0 0
      %341 = vmatpush.bf16.msra.mxu0 %v333
      %342 = vmatpush.bf16.msra.mxu0 %v319
      %343 = vmatmul.bf16.gmra.mxu0 %v324
      %v344 = vpop.f32.mrf.mxu0
      %v345 = vadd.f32 0.0, %v344
      %v346 = vpop.f32.mrf.mxu0
      %v347 = vadd.f32 0.0, %v346
      %348 = vmatmul.bf16.gmra.mxu0 %v327
      %v349 = vpop.f32.mrf.mxu0
      %v350 = vadd.f32 0.0, %v349
      %v351 = vpop.f32.mrf.mxu0
      %352 = vdwg.mxu0
      %v353 = vld [vmem:[%s1] sm:$0xf]
      %v354 = vpack.c.bf16 %v347, %v345
      %v355 = vpack.c.bf16 %v350, %v350
      %v357 = vsel %vm247, %v354, 0
      %v360 = vsel %vm247, %v355, 0
      %vm362 = vcmask 1043456
      %v364 = vsel %vm362, %v353, 0
      %366 = vmatpush.bf16.msra.mxu0 0
      %367 = vmatpush.bf16.msra.mxu0 0
      %368 = vmatpush.bf16.msra.mxu0 0
      %369 = vmatpush.bf16.msra.mxu0 0
      %370 = vmatpush.bf16.msra.mxu0 0
      %371 = vmatpush.bf16.msra.mxu0 0
      %372 = vmatpush.bf16.msra.mxu0 0
      %373 = vmatpush.bf16.msra.mxu0 %v364
      %374 = vmatmul.bf16.gmra.mxu0 %v357
      %v375 = vpop.f32.mrf.mxu0
      %v376 = vadd.f32 0.0, %v375
      %v377 = vpop.f32.mrf.mxu0
      %v378 = vadd.f32 0.0, %v377
      %379 = vmatmul.bf16.gmra.mxu0 %v360
      %v380 = vpop.f32.mrf.mxu0
      %v381 = vadd.f32 0.0, %v380
      %v382 = vpop.f32.mrf.mxu0
      %383 = vdwg.mxu0
      %v384 = vadd.f32 %v229, %v376
      %v385 = vadd.f32 %v230, %v378
      %v386 = vadd.f32 %v231, %v381
      %387 = vrot.lane.b32.xlu0 %v241, 120
      %v388 = vpop.permute.xlu0 %387
      %389 = vrot.lane.b32.xlu0 %v242, 120
      %v390 = vpop.permute.xlu0 %389
      %391 = vrot.lane.b32.xlu0 %v241, 88
      %v392 = vpop.permute.xlu0 %391
      %393 = vrot.lane.b32.xlu0 %v242, 88
      %v394 = vpop.permute.xlu0 %393
      %v396 = vsel %vm247, %v388, 0
      %v399 = vsel %vm247, %v390, 0
      %v402 = vsel %vm247, %v392, 0
      %v405 = vsel %vm247, %v394, 0
      %407 = vmatpush.bf16.xpose.msra.mxu0 0
      %408 = vmatpush.bf16.xpose.msra.mxu0 0
      %409 = vmatpush.bf16.xpose.msra.mxu0 0
      %410 = vmatpush.bf16.xpose.msra.mxu0 0
      %411 = vmatpush.bf16.xpose.msra.mxu0 0
      %412 = vmatpush.bf16.xpose.msra.mxu0 0
      %413 = vmatpush.bf16.xpose.msra.mxu0 %v405
      %414 = vmatpush.bf16.xpose.msra.mxu0 %v402
      %415 = vmatmul.bf16.gmra.mxu0 %v396
      %v416 = vpop.f32.mrf.mxu0
      %v417 = vadd.f32 0.0, %v416
      %v418 = vpop.f32.mrf.mxu0
      %v419 = vadd.f32 0.0, %v418
      %420 = vmatmul.bf16.gmra.mxu0 %v399
      %v421 = vpop.f32.mrf.mxu0
      %v422 = vadd.f32 0.0, %v421
      %v423 = vpop.f32.mrf.mxu0
      %424 = vdwg.mxu0
      %v425 = vmul.f32 %v417, 0.35355338
      %v426 = vmul.f32 %v419, 0.35355338
      %v427 = vmul.f32 %v422, 0.35355338
      %v428 = vsel %vm281, %v425, -inf
      %429 = vmax.xlane.f32.xlu0 %v428
      %v430 = vpop.xlane.xlu0 %429
      %v431 = vsel %vm281, %v426, -inf
      %432 = vmax.xlane.f32.xlu0 %v431
      %v433 = vpop.xlane.xlu0 %432
      %v434 = vsel %vm288, %v427, -inf
      %435 = vmax.xlane.f32.xlu0 %v434
      %v436 = vpop.xlane.xlu0 %435
      %v437 = vsub.f32 %v425, %v430
      %v438 = vsub.f32 %v426, %v433
      %v439 = vsub.f32 %v427, %v436
      %v440 = vmul.f32 %v437, 1.442695
      %v441 = vpow.pop %v440
      %v442 = vmul.f32 %v438, 1.442695
      %v443 = vpow.pop %v442
      %v444 = vmul.f32 %v439, 1.442695
      %v445 = vpow.pop %v444
      %v446 = vsel %vm281, %v441, 0.0
      %447 = vadd.xlane.f32.xlu0 %v446
      %v448 = vpop.xlane.xlu0 %447
      %v449 = vsel %vm281, %v443, 0.0
      %450 = vadd.xlane.f32.xlu0 %v449
      %v451 = vpop.xlane.xlu0 %450
      %v452 = vsel %vm288, %v445, 0.0
      %453 = vadd.xlane.f32.xlu0 %v452
      %v454 = vpop.xlane.xlu0 %453
      %v455 = vrcp.pop %v448
      %v456 = vrcp.pop %v451
      %v457 = vrcp.pop %v454
      %v458 = vmul.f32 %v441, %v455
      %v459 = vmul.f32 %v443, %v456
      %v460 = vmul.f32 %v445, %v457
      %v461 = vpack.c.bf16 %v459, %v458
      %v462 = vpack.c.bf16 %v460, %v460
      %463 = vrot.lane.b32.xlu0 %v241, 56
      %v464 = vpop.permute.xlu0 %463
      %465 = vrot.lane.b32.xlu0 %v242, 56
      %v466 = vpop.permute.xlu0 %465
      %v469 = vsel %vm281, %v461, 0
      %v472 = vsel %vm281, %v462, 0
      %v475 = vand.u32 %v466, %v331
      %477 = vmatpush.bf16.msra.mxu0 0
      %478 = vmatpush.bf16.msra.mxu0 0
      %479 = vmatpush.bf16.msra.mxu0 0
      %480 = vmatpush.bf16.msra.mxu0 0
      %481 = vmatpush.bf16.msra.mxu0 0
      %482 = vmatpush.bf16.msra.mxu0 0
      %483 = vmatpush.bf16.msra.mxu0 %v475
      %484 = vmatpush.bf16.msra.mxu0 %v464
      %485 = vmatmul.bf16.gmra.mxu0 %v469
      %v486 = vpop.f32.mrf.mxu0
      %v487 = vadd.f32 0.0, %v486
      %v488 = vpop.f32.mrf.mxu0
      %v489 = vadd.f32 0.0, %v488
      %490 = vmatmul.bf16.gmra.mxu0 %v472
      %v491 = vpop.f32.mrf.mxu0
      %v492 = vadd.f32 0.0, %v491
      %v493 = vpop.f32.mrf.mxu0
      %494 = vdwg.mxu0
      %v495 = vld [vmem:[%s1 + $0x4] sm:$0xf]
      %v496 = vpack.c.bf16 %v489, %v487
      %v497 = vpack.c.bf16 %v492, %v492
      %v499 = vsel %vm247, %v496, 0
      %v502 = vsel %vm247, %v497, 0
      %v505 = vsel %vm362, %v495, 0
      %507 = vmatpush.bf16.msra.mxu0 0
      %508 = vmatpush.bf16.msra.mxu0 0
      %509 = vmatpush.bf16.msra.mxu0 0
      %510 = vmatpush.bf16.msra.mxu0 0
      %511 = vmatpush.bf16.msra.mxu0 0
      %512 = vmatpush.bf16.msra.mxu0 0
      %513 = vmatpush.bf16.msra.mxu0 0
      %514 = vmatpush.bf16.msra.mxu0 %v505
      %515 = vmatmul.bf16.gmra.mxu0 %v499
      %v516 = vpop.f32.mrf.mxu0
      %v517 = vadd.f32 0.0, %v516
      %v518 = vpop.f32.mrf.mxu0
      %v519 = vadd.f32 0.0, %v518
      %520 = vmatmul.bf16.gmra.mxu0 %v502
      %v521 = vpop.f32.mrf.mxu0
      %v522 = vadd.f32 0.0, %v521
      %v523 = vpop.f32.mrf.mxu0
      %524 = vdwg.mxu0
      %v525 = vadd.f32 %v384, %v517
      %v526 = vadd.f32 %v385, %v519
      %v527 = vadd.f32 %v386, %v522
      %528 = vrot.lane.b32.xlu0 %v241, 112
      %v529 = vpop.permute.xlu0 %528
      %530 = vrot.lane.b32.xlu0 %v242, 112
      %v531 = vpop.permute.xlu0 %530
      %532 = vrot.lane.b32.xlu0 %v241, 80
      %v533 = vpop.permute.xlu0 %532
      %534 = vrot.lane.b32.xlu0 %v242, 80
      %v535 = vpop.permute.xlu0 %534
      %v537 = vsel %vm247, %v529, 0
      %v540 = vsel %vm247, %v531, 0
      %v543 = vsel %vm247, %v533, 0
      %v546 = vsel %vm247, %v535, 0
      %548 = vmatpush.bf16.xpose.msra.mxu0 0
      %549 = vmatpush.bf16.xpose.msra.mxu0 0
      %550 = vmatpush.bf16.xpose.msra.mxu0 0
      %551 = vmatpush.bf16.xpose.msra.mxu0 0
      %552 = vmatpush.bf16.xpose.msra.mxu0 0
      %553 = vmatpush.bf16.xpose.msra.mxu0 0
      %554 = vmatpush.bf16.xpose.msra.mxu0 %v546
      %555 = vmatpush.bf16.xpose.msra.mxu0 %v543
      %556 = vmatmul.bf16.gmra.mxu0 %v537
      %v557 = vpop.f32.mrf.mxu0
      %v558 = vadd.f32 0.0, %v557
      %v559 = vpop.f32.mrf.mxu0
      %v560 = vadd.f32 0.0, %v559
      %561 = vmatmul.bf16.gmra.mxu0 %v540
      %v562 = vpop.f32.mrf.mxu0
      %v563 = vadd.f32 0.0, %v562
      %v564 = vpop.f32.mrf.mxu0
      %565 = vdwg.mxu0
      %v566 = vmul.f32 %v558, 0.35355338
      %v567 = vmul.f32 %v560, 0.35355338
      %v568 = vmul.f32 %v563, 0.35355338
      %v569 = vsel %vm281, %v566, -inf
      %570 = vmax.xlane.f32.xlu0 %v569
      %v571 = vpop.xlane.xlu0 %570
      %v572 = vsel %vm281, %v567, -inf
      %573 = vmax.xlane.f32.xlu0 %v572
      %v574 = vpop.xlane.xlu0 %573
      %v575 = vsel %vm288, %v568, -inf
      %576 = vmax.xlane.f32.xlu0 %v575
      %v577 = vpop.xlane.xlu0 %576
      %v578 = vsub.f32 %v566, %v571
      %v579 = vsub.f32 %v567, %v574
      %v580 = vsub.f32 %v568, %v577
      %v581 = vmul.f32 %v578, 1.442695
      %v582 = vpow.pop %v581
      %v583 = vmul.f32 %v579, 1.442695
      %v584 = vpow.pop %v583
      %v585 = vmul.f32 %v580, 1.442695
      %v586 = vpow.pop %v585
      %v587 = vsel %vm281, %v582, 0.0
      %588 = vadd.xlane.f32.xlu0 %v587
      %v589 = vpop.xlane.xlu0 %588
      %v590 = vsel %vm281, %v584, 0.0
      %591 = vadd.xlane.f32.xlu0 %v590
      %v592 = vpop.xlane.xlu0 %591
      %v593 = vsel %vm288, %v586, 0.0
      %594 = vadd.xlane.f32.xlu0 %v593
      %v595 = vpop.xlane.xlu0 %594
      %v596 = vrcp.pop %v589
      %v597 = vrcp.pop %v592
      %v598 = vrcp.pop %v595
      %v599 = vmul.f32 %v582, %v596
      %v600 = vmul.f32 %v584, %v597
      %v601 = vmul.f32 %v586, %v598
      %v602 = vpack.c.bf16 %v600, %v599
      %v603 = vpack.c.bf16 %v601, %v601
      %604 = vrot.lane.b32.xlu0 %v241, 48
      %v605 = vpop.permute.xlu0 %604
      %606 = vrot.lane.b32.xlu0 %v242, 48
      %v607 = vpop.permute.xlu0 %606
      %v610 = vsel %vm281, %v602, 0
      %v613 = vsel %vm281, %v603, 0
      %v616 = vand.u32 %v607, %v331
      %618 = vmatpush.bf16.msra.mxu0 0
      %619 = vmatpush.bf16.msra.mxu0 0
      %620 = vmatpush.bf16.msra.mxu0 0
      %621 = vmatpush.bf16.msra.mxu0 0
      %622 = vmatpush.bf16.msra.mxu0 0
      %623 = vmatpush.bf16.msra.mxu0 0
      %624 = vmatpush.bf16.msra.mxu0 %v616
      %625 = vmatpush.bf16.msra.mxu0 %v605
      %626 = vmatmul.bf16.gmra.mxu0 %v610
      %v627 = vpop.f32.mrf.mxu0
      %v628 = vadd.f32 0.0, %v627
      %v629 = vpop.f32.mrf.mxu0
      %v630 = vadd.f32 0.0, %v629
      %631 = vmatmul.bf16.gmra.mxu0 %v613
      %v632 = vpop.f32.mrf.mxu0
      %v633 = vadd.f32 0.0, %v632
      %v634 = vpop.f32.mrf.mxu0
      %635 = vdwg.mxu0
      %v636 = vld [vmem:[%s1 + $0x8] sm:$0xf]
      %v637 = vpack.c.bf16 %v630, %v628
      %v638 = vpack.c.bf16 %v633, %v633
      %v640 = vsel %vm247, %v637, 0
      %v643 = vsel %vm247, %v638, 0
      %v646 = vsel %vm362, %v636, 0
      %648 = vmatpush.bf16.msra.mxu0 0
      %649 = vmatpush.bf16.msra.mxu0 0
      %650 = vmatpush.bf16.msra.mxu0 0
      %651 = vmatpush.bf16.msra.mxu0 0
      %652 = vmatpush.bf16.msra.mxu0 0
      %653 = vmatpush.bf16.msra.mxu0 0
      %654 = vmatpush.bf16.msra.mxu0 0
      %655 = vmatpush.bf16.msra.mxu0 %v646
      %656 = vmatmul.bf16.gmra.mxu0 %v640
      %v657 = vpop.f32.mrf.mxu0
      %v658 = vadd.f32 0.0, %v657
      %v659 = vpop.f32.mrf.mxu0
      %v660 = vadd.f32 0.0, %v659
      %661 = vmatmul.bf16.gmra.mxu0 %v643
      %v662 = vpop.f32.mrf.mxu0
      %v663 = vadd.f32 0.0, %v662
      %v664 = vpop.f32.mrf.mxu0
      %665 = vdwg.mxu0
      %v666 = vadd.f32 %v525, %v658
      %v667 = vadd.f32 %v526, %v660
      %v668 = vadd.f32 %v527, %v663
      %669 = vrot.lane.b32.xlu0 %v241, 104
      %v670 = vpop.permute.xlu0 %669
      %671 = vrot.lane.b32.xlu0 %v242, 104
      %v672 = vpop.permute.xlu0 %671
      %673 = vrot.lane.b32.xlu0 %v241, 72
      %v674 = vpop.permute.xlu0 %673
      %675 = vrot.lane.b32.xlu0 %v242, 72
      %v676 = vpop.permute.xlu0 %675
      %v678 = vsel %vm247, %v670, 0
      %v681 = vsel %vm247, %v672, 0
      %v684 = vsel %vm247, %v674, 0
      %v687 = vsel %vm247, %v676, 0
      %689 = vmatpush.bf16.xpose.msra.mxu0 0
      %690 = vmatpush.bf16.xpose.msra.mxu0 0
      %691 = vmatpush.bf16.xpose.msra.mxu0 0
      %692 = vmatpush.bf16.xpose.msra.mxu0 0
      %693 = vmatpush.bf16.xpose.msra.mxu0 0
      %694 = vmatpush.bf16.xpose.msra.mxu0 0
      %695 = vmatpush.bf16.xpose.msra.mxu0 %v687
      %696 = vmatpush.bf16.xpose.msra.mxu0 %v684
      %697 = vmatmul.bf16.gmra.mxu0 %v678
      %v698 = vpop.f32.mrf.mxu0
      %v699 = vadd.f32 0.0, %v698
      %v700 = vpop.f32.mrf.mxu0
      %v701 = vadd.f32 0.0, %v700
      %702 = vmatmul.bf16.gmra.mxu0 %v681
      %v703 = vpop.f32.mrf.mxu0
      %v704 = vadd.f32 0.0, %v703
      %v705 = vpop.f32.mrf.mxu0
      %706 = vdwg.mxu0
      %v707 = vmul.f32 %v699, 0.35355338
      %v708 = vmul.f32 %v701, 0.35355338
      %v709 = vmul.f32 %v704, 0.35355338
      %v710 = vsel %vm281, %v707, -inf
      %711 = vmax.xlane.f32.xlu0 %v710
      %v712 = vpop.xlane.xlu0 %711
      %v713 = vsel %vm281, %v708, -inf
      %714 = vmax.xlane.f32.xlu0 %v713
      %v715 = vpop.xlane.xlu0 %714
      %v716 = vsel %vm288, %v709, -inf
      %717 = vmax.xlane.f32.xlu0 %v716
      %v718 = vpop.xlane.xlu0 %717
      %v719 = vsub.f32 %v707, %v712
      %v720 = vsub.f32 %v708, %v715
      %v721 = vsub.f32 %v709, %v718
      %v722 = vmul.f32 %v719, 1.442695
      %v723 = vpow.pop %v722
      %v724 = vmul.f32 %v720, 1.442695
      %v725 = vpow.pop %v724
      %v726 = vmul.f32 %v721, 1.442695
      %v727 = vpow.pop %v726
      %v728 = vsel %vm281, %v723, 0.0
      %729 = vadd.xlane.f32.xlu0 %v728
      %v730 = vpop.xlane.xlu0 %729
      %v731 = vsel %vm281, %v725, 0.0
      %732 = vadd.xlane.f32.xlu0 %v731
      %v733 = vpop.xlane.xlu0 %732
      %v734 = vsel %vm288, %v727, 0.0
      %735 = vadd.xlane.f32.xlu0 %v734
      %v736 = vpop.xlane.xlu0 %735
      %v737 = vrcp.pop %v730
      %v738 = vrcp.pop %v733
      %v739 = vrcp.pop %v736
      %v740 = vmul.f32 %v723, %v737
      %v741 = vmul.f32 %v725, %v738
      %v742 = vmul.f32 %v727, %v739
      %v743 = vpack.c.bf16 %v741, %v740
      %v744 = vpack.c.bf16 %v742, %v742
      %745 = vrot.lane.b32.xlu0 %v241, 40
      %v746 = vpop.permute.xlu0 %745
      %747 = vrot.lane.b32.xlu0 %v242, 40
      %v748 = vpop.permute.xlu0 %747
      %v751 = vsel %vm281, %v743, 0
      %v754 = vsel %vm281, %v744, 0
      %v757 = vand.u32 %v748, %v331
      %759 = vmatpush.bf16.msra.mxu0 0
      %760 = vmatpush.bf16.msra.mxu0 0
      %761 = vmatpush.bf16.msra.mxu0 0
      %762 = vmatpush.bf16.msra.mxu0 0
      %763 = vmatpush.bf16.msra.mxu0 0
      %764 = vmatpush.bf16.msra.mxu0 0
      %765 = vmatpush.bf16.msra.mxu0 %v757
      %766 = vmatpush.bf16.msra.mxu0 %v746
      %767 = vmatmul.bf16.gmra.mxu0 %v751
      %v768 = vpop.f32.mrf.mxu0
      %v769 = vadd.f32 0.0, %v768
      %v770 = vpop.f32.mrf.mxu0
      %v771 = vadd.f32 0.0, %v770
      %772 = vmatmul.bf16.gmra.mxu0 %v754
      %v773 = vpop.f32.mrf.mxu0
      %v774 = vadd.f32 0.0, %v773
      %v775 = vpop.f32.mrf.mxu0
      %776 = vdwg.mxu0
      %v777 = vld [vmem:[%s1 + $0xc] sm:$0xf]
      %v778 = vpack.c.bf16 %v771, %v769
      %v779 = vpack.c.bf16 %v774, %v774
      %v781 = vsel %vm247, %v778, 0
      %v784 = vsel %vm247, %v779, 0
      %v787 = vsel %vm362, %v777, 0
      %789 = vmatpush.bf16.msra.mxu0 0
      %790 = vmatpush.bf16.msra.mxu0 0
      %791 = vmatpush.bf16.msra.mxu0 0
      %792 = vmatpush.bf16.msra.mxu0 0
      %793 = vmatpush.bf16.msra.mxu0 0
      %794 = vmatpush.bf16.msra.mxu0 0
      %795 = vmatpush.bf16.msra.mxu0 0
      %796 = vmatpush.bf16.msra.mxu0 %v787
      %797 = vmatmul.bf16.gmra.mxu0 %v781
      %v798 = vpop.f32.mrf.mxu0
      %v799 = vadd.f32 0.0, %v798
      %v800 = vpop.f32.mrf.mxu0
      %v801 = vadd.f32 0.0, %v800
      %802 = vmatmul.bf16.gmra.mxu0 %v784
      %v803 = vpop.f32.mrf.mxu0
      %v804 = vadd.f32 0.0, %v803
      %v805 = vpop.f32.mrf.mxu0
      %806 = vdwg.mxu0
      %v807 = vadd.f32 %v666, %v799
      %v808 = vadd.f32 %v667, %v801
      %v809 = vadd.f32 %v668, %v804
      %v810 = vpack.c.bf16 %v807, %v807
      %v811 = vpack.c.bf16 %v808, %v808
      %v812 = vpack.c.bf16 %v809, %v809
      %vm813 = vcmask 257024
      %814 = vst.msk [vmem:[%s217] sm:$0xf] %vm813, %v810
      %815 = vst.msk [vmem:[%s217 + $0x4] sm:$0xf] %vm813, %v811
      %vm816 = vcmask 253952
      %vm817 = vsmask.f32 256
      %vm818 = vmand %vm816, %vm817
      %v819 = vld [vmem:[%s217 + $0x8] sm:$0x1]
      %v820 = vsel %vm818, %v812, %v819
      %821 = vst [vmem:[%s217 + $0x8] sm:$0x1] %v820
      %p822 = scmp.lt.s32.totalorder %s15, 1
      %s823 = scalar_select %p822, %s15, 1
      %s824 = smul.addr %s823, 3
      %s825 = smul.addr %s824, 4
      %s826 = scalar_lea.vmem %s4, %s825
      // Predicated region
      $region37: #{vit_forward.12} parent=35 // pred_check
        %p827 = pneg %p127
      $region38: #{vit_forward.12} parent=35 // pred_check_branch
        %829 = sbr.rel (%p827) target = $region40
      $region39: #{vit_forward.12} parent=35 // pred_region
        _
      $region40: #{vit_forward.12} parent=35 // pred_fallthru
        _
    $region36: #{vit_forward.12} parent=5 // pred_fallthru
      _
    %p830 = scmp.le.s32.totalorder 2, %s10
    // Predicated region
    $region41: #{vit_forward.12} parent=5 // pred_check
      %p831 = pneg %p830
    $region42: #{vit_forward.12} parent=5 // pred_check_branch
      %833 = sbr.rel (%p831) target = $region44
    $region43: #{vit_forward.12} parent=5 // pred_region
      %s834 = ssub.s32 %s10, 2
      // Predicated region
      $region45: #{vit_forward.12} parent=43 // pred_check
        %p835 = pneg %p133
      $region46: #{vit_forward.12} parent=43 // pred_check_branch
        %837 = sbr.rel (%p835) target = $region48
      $region47: #{vit_forward.12} parent=43 // pred_region
        %p838 = scmp.lt.s32.totalorder %s16, 1
        %s839 = scalar_select %p838, %s16, 1
        %s840 = smul.addr %s839, 3
        %s841 = smul.addr %s840, 4
        %s842 = scalar_lea.vmem %s4, %s841
      $region48: #{vit_forward.12} parent=43 // pred_fallthru
        _
    $region44: #{vit_forward.12} parent=5 // pred_fallthru
      _
  $region6: #{vit_forward.12} parent=0 // loop_footer
    %s14 = sadd.s32 1, %s10
  $region7: #{vit_forward.12} parent=0 // loop_footer_branch
    %9 = sbr.rel target = $region3
  $region8: #{vit_forward.12} parent=0 // loop_exit
    _

// kernel: vit_forward.13
$region0: #{vit_forward.13}
  #allocation0 [shape = 'u32[]', space=smem, size = 0x4, offset = 0x4, fixed_abs, tag = 'smem constant byte address 0x4 - core index']
  #allocation1 [shape = 'u32[72,128]{1,0:T(1,128)}', space=vmem, size = 0x9000, scoped, tag = 'internal scratch']
  %s0 = inlined_call_operand.vmem [shape: bf16[34,32], index: 0, kind: input, shape index: {}]
  %s1 = inlined_call_operand.vmem [shape: f32[1,32], index: 1, kind: input, shape index: {}]
  %s2 = inlined_call_operand.vmem [shape: f32[1,32], index: 2, kind: input, shape index: {}]
  %s3 = inlined_call_operand.vmem [shape: bf16[32,128], index: 3, kind: input, shape index: {}]
  %s4 = inlined_call_operand.vmem [shape: f32[1,128], index: 4, kind: input, shape index: {}]
  %s5 = inlined_call_operand.vmem [shape: bf16[34,128], index: 5, kind: output, shape index: {}]
  %s6 = sld [smem:[#allocation0]]
  $region30: #{vit_forward.13} parent=0
    _
  %s8 = ssub.s32 1, %s6
  %s9 = scalar_select 0, %s8, %s6
  // Predicated region
  $region2: #{vit_forward.13} parent=0 // pred_check
    _
  $region3: #{vit_forward.13} parent=0 // pred_check_branch
    %11 = sbr.rel (0) target = $region5
  $region4: #{vit_forward.13} parent=0 // pred_region
    _
  $region5: #{vit_forward.13} parent=0 // pred_fallthru
    _
  // Predicated region
  $region6: #{vit_forward.13} parent=0 // pred_check
    _
  $region7: #{vit_forward.13} parent=0 // pred_check_branch
    %13 = sbr.rel (0) target = $region9
  $region8: #{vit_forward.13} parent=0 // pred_region
    _
  $region9: #{vit_forward.13} parent=0 // pred_fallthru
    _
  // Predicated region
  $region10: #{vit_forward.13} parent=0 // pred_check
    _
  $region11: #{vit_forward.13} parent=0 // pred_check_branch
    %15 = sbr.rel (0) target = $region13
  $region12: #{vit_forward.13} parent=0 // pred_region
    _
  $region13: #{vit_forward.13} parent=0 // pred_fallthru
    _
  // Predicated region
  $region14: #{vit_forward.13} parent=0 // pred_check
    _
  $region15: #{vit_forward.13} parent=0 // pred_check_branch
    %17 = sbr.rel (0) target = $region17
  $region16: #{vit_forward.13} parent=0 // pred_region
    _
  $region17: #{vit_forward.13} parent=0 // pred_fallthru
    _
  // Predicated region
  $region18: #{vit_forward.13} parent=0 // pred_check
    _
  $region19: #{vit_forward.13} parent=0 // pred_check_branch
    %19 = sbr.rel (0) target = $region21
  $region20: #{vit_forward.13} parent=0 // pred_region
    _
  $region21: #{vit_forward.13} parent=0 // pred_fallthru
    _
  %v21 = vld [vmem:[%s0] sm:$0xf]
  %v22 = vld [vmem:[%s0 + $0x4] sm:$0xf]
  %v23 = vld [vmem:[%s0 + $0x8] sm:$0xf]
  %v24 = vld [vmem:[%s0 + $0xc] sm:$0xf]
  %v25 = vld [vmem:[%s0 + $0x10] sm:$0x1]
  %v26 = vunpack.c.l.bf16 %v21
  %v27 = vunpack.c.l.bf16 %v22
  %v28 = vunpack.c.l.bf16 %v23
  %v29 = vunpack.c.l.bf16 %v24
  %v30 = vunpack.c.l.bf16 %v25
  %vm31 = vcmask 261120
  %v32 = vsel %vm31, %v26, 0.0
  %33 = vadd.xlane.f32.xlu0 %v32
  %v34 = vpop.xlane.xlu0 %33
  %v35 = vsel %vm31, %v27, 0.0
  %36 = vadd.xlane.f32.xlu0 %v35
  %v37 = vpop.xlane.xlu0 %36
  %v38 = vsel %vm31, %v28, 0.0
  %39 = vadd.xlane.f32.xlu0 %v38
  %v40 = vpop.xlane.xlu0 %39
  %v41 = vsel %vm31, %v29, 0.0
  %42 = vadd.xlane.f32.xlu0 %v41
  %v43 = vpop.xlane.xlu0 %42
  %vm44 = vcmask 254976
  %v45 = vsel %vm44, %v30, 0.0
  %46 = vadd.xlane.f32.xlu0 %v45
  %v47 = vpop.xlane.xlu0 %46
  %v48 = vrcp.pop 32.0
  %v49 = vmul.f32 32.0, %v48
  %v50 = vsub.f32 1.0, %v49
  %v51 = vmul.f32 %v48, %v50
  %v52 = vadd.f32 %v48, %v51
  %vm53 = vweird.f32 %v48
  %v54 = vsel %vm53, %v48, %v52
  %v55 = vmul.f32 %v34, %v54
  %v56 = vmul.f32 %v37, %v54
  %v57 = vmul.f32 %v40, %v54
  %v58 = vmul.f32 %v43, %v54
  %v59 = vmul.f32 %v47, %v54
  %v60 = vsub.f32 %v26, %v55
  %v61 = vsub.f32 %v27, %v56
  %v62 = vsub.f32 %v28, %v57
  %v63 = vsub.f32 %v29, %v58
  %v64 = vsub.f32 %v30, %v59
  %v65 = vmul.f32 %v60, %v60
  %v66 = vmul.f32 %v61, %v61
  %v67 = vmul.f32 %v62, %v62
  %v68 = vmul.f32 %v63, %v63
  %v69 = vmul.f32 %v64, %v64
  %v70 = vsel %vm31, %v65, 0.0
  %71 = vadd.xlane.f32.xlu0 %v70
  %v72 = vpop.xlane.xlu0 %71
  %v73 = vsel %vm31, %v66, 0.0
  %74 = vadd.xlane.f32.xlu0 %v73
  %v75 = vpop.xlane.xlu0 %74
  %v76 = vsel %vm31, %v67, 0.0
  %77 = vadd.xlane.f32.xlu0 %v76
  %v78 = vpop.xlane.xlu0 %77
  %v79 = vsel %vm31, %v68, 0.0
  %80 = vadd.xlane.f32.xlu0 %v79
  %v81 = vpop.xlane.xlu0 %80
  %v82 = vsel %vm44, %v69, 0.0
  %83 = vadd.xlane.f32.xlu0 %v82
  %v84 = vpop.xlane.xlu0 %83
  %v85 = vmul.f32 %v72, %v54
  %v86 = vmul.f32 %v75, %v54
  %v87 = vmul.f32 %v78, %v54
  %v88 = vmul.f32 %v81, %v54
  %v89 = vmul.f32 %v84, %v54
  %v90 = vadd.f32 %v85, 1e-05
  %v91 = vadd.f32 %v86, 1e-05
  %v92 = vadd.f32 %v87, 1e-05
  %v93 = vadd.f32 %v88, 1e-05
  %v94 = vadd.f32 %v89, 1e-05
  %v95 = vrsqrt.pop %v90
  %v96 = vmul.f32 %v95, %v90
  %v97 = vmul.f32 %v96, %v95
  %v98 = vmul.f32 0.5, %v97
  %v99 = vsub.f32 1.5, %v98
  %v100 = vmul.f32 %v95, %v99
  %vm101 = vweird.f32 %v90
  %vm102 = vweird.f32 %v95
  %vm103 = vmor %vm101, %vm102
  %v104 = vsel %vm103, %v95, %v100
  %v105 = vrsqrt.pop %v91
  %v106 = vmul.f32 %v105, %v91
  %v107 = vmul.f32 %v106, %v105
  %v108 = vmul.f32 0.5, %v107
  %v109 = vsub.f32 1.5, %v108
  %v110 = vmul.f32 %v105, %v109
  %vm111 = vweird.f32 %v91
  %vm112 = vweird.f32 %v105
  %vm113 = vmor %vm111, %vm112
  %v114 = vsel %vm113, %v105, %v110
  %v115 = vrsqrt.pop %v92
  %v116 = vmul.f32 %v115, %v92
  %v117 = vmul.f32 %v116, %v115
  %v118 = vmul.f32 0.5, %v117
  %v119 = vsub.f32 1.5, %v118
  %v120 = vmul.f32 %v115, %v119
  %vm121 = vweird.f32 %v92
  %vm122 = vweird.f32 %v115
  %vm123 = vmor %vm121, %vm122
  %v124 = vsel %vm123, %v115, %v120
  %v125 = vrsqrt.pop %v93
  %v126 = vmul.f32 %v125, %v93
  %v127 = vmul.f32 %v126, %v125
  %v128 = vmul.f32 0.5, %v127
  %v129 = vsub.f32 1.5, %v128
  %v130 = vmul.f32 %v125, %v129
  %vm131 = vweird.f32 %v93
  %vm132 = vweird.f32 %v125
  %vm133 = vmor %vm131, %vm132
  %v134 = vsel %vm133, %v125, %v130
  %v135 = vrsqrt.pop %v94
  %v136 = vmul.f32 %v135, %v94
  %v137 = vmul.f32 %v136, %v135
  %v138 = vmul.f32 0.5, %v137
  %v139 = vsub.f32 1.5, %v138
  %v140 = vmul.f32 %v135, %v139
  %vm141 = vweird.f32 %v94
  %vm142 = vweird.f32 %v135
  %vm143 = vmor %vm141, %vm142
  %v144 = vsel %vm143, %v135, %v140
  %v145 = vmul.f32 %v60, %v104
  %v146 = vmul.f32 %v61, %v114
  %v147 = vmul.f32 %v62, %v124
  %v148 = vmul.f32 %v63, %v134
  %v149 = vmul.f32 %v64, %v144
  %v150 = vld [vmem:[%s1] sm:$0x1]
  %v152 = vperm.slane %v150, 0
  %v154 = vmul.f32 %v145, %v152
  %v155 = vmul.f32 %v146, %v152
  %v156 = vmul.f32 %v147, %v152
  %v157 = vmul.f32 %v148, %v152
  %v158 = vmul.f32 %v149, %v152
  %v159 = vld [vmem:[%s2] sm:$0x1]
  %v161 = vperm.slane %v159, 0
  %v163 = vadd.f32 %v154, %v161
  %v164 = vadd.f32 %v155, %v161
  %v165 = vadd.f32 %v156, %v161
  %v166 = vadd.f32 %v157, %v161
  %v167 = vadd.f32 %v158, %v161
  %v168 = vpack.c.bf16 %v164, %v163
  %v169 = vpack.c.bf16 %v166, %v165
  %v170 = vpack.c.bf16 %v167, %v167
  %v171 = vld [vmem:[%s3] sm:$0xf]
  %v172 = vld [vmem:[%s3 + $0x4] sm:$0xf]
  %v173 = vld [vmem:[%s3 + $0x8] sm:$0xf]
  %v174 = vld [vmem:[%s3 + $0xc] sm:$0xf]
  %v175 = vld [vmem:[%s4] sm:$0x1]
  %v177 = vperm.slane %v175, 0
  %v183 = vunpack.c.l.b16 %v171
  %v184 = vunpack.c.l.b16 %v172
  %v185 = vunpack.c.l.b16 %v173
  %v186 = vunpack.c.l.b16 %v174
  %v187 = vpack.c.b16 %v184, %v183
  %v188 = vpack.c.b16 %v186, %v185
  %v192 = vsel %vm31, %v168, 0
  %v195 = vsel %vm31, %v169, 0
  %v198 = vsel %vm31, %v170, 0
  %200 = vmatpush.bf16.msra.mxu0 0
  %201 = vmatpush.bf16.msra.mxu0 0
  %202 = vmatpush.bf16.msra.mxu0 0
  %203 = vmatpush.bf16.msra.mxu0 0
  %204 = vmatpush.bf16.msra.mxu0 0
  %205 = vmatpush.bf16.msra.mxu0 0
  %206 = vmatpush.bf16.msra.mxu0 %v188
  %207 = vmatpush.bf16.msra.mxu0 %v187
  %208 = vmatmul.bf16.gmra.mxu0 %v192
  %v209 = vpop.f32.mrf.mxu0
  %v210 = vadd.f32 %v177, %v209
  %v211 = vpop.f32.mrf.mxu0
  %v212 = vadd.f32 %v177, %v211
  %213 = vmatmul.bf16.gmra.mxu0 %v195
  %v214 = vpop.f32.mrf.mxu0
  %v215 = vadd.f32 %v177, %v214
  %v216 = vpop.f32.mrf.mxu0
  %v217 = vadd.f32 %v177, %v216
  %218 = vmatmul.bf16.gmra.mxu0 %v198
  %v219 = vpop.f32.mrf.mxu0
  %v220 = vadd.f32 %v177, %v219
  %v221 = vpop.f32.mrf.mxu0
  %222 = vdwg.mxu0
  %v223 = vmul.f32 %v210, %v210
  %v224 = vmul.f32 %v212, %v212
  %v225 = vmul.f32 %v215, %v215
  %v226 = vmul.f32 %v217, %v217
  %v227 = vmul.f32 %v220, %v220
  %v228 = vmul.f32 %v210, %v223
  %v229 = vmul.f32 %v212, %v224
  %v230 = vmul.f32 %v215, %v225
  %v231 = vmul.f32 %v217, %v226
  %v232 = vmul.f32 %v220, %v227
  %v233 = vmul.f32 %v228, 0.044715
  %v234 = vmul.f32 %v229, 0.044715
  %v235 = vmul.f32 %v230, 0.044715
  %v236 = vmul.f32 %v231, 0.044715
  %v237 = vmul.f32 %v232, 0.044715
  %v238 = vadd.f32 %v210, %v233
  %v239 = vadd.f32 %v212, %v234
  %v240 = vadd.f32 %v215, %v235
  %v241 = vadd.f32 %v217, %v236
  %v242 = vadd.f32 %v220, %v237
  %v243 = vmul.f32 %v238, 0.7978846
  %v244 = vmul.f32 %v239, 0.7978846
  %v245 = vmul.f32 %v240, 0.7978846
  %v246 = vmul.f32 %v241, 0.7978846
  %v247 = vmul.f32 %v242, 0.7978846
  %v248 = vtanh.pop %v243
  %v249 = vtanh.pop %v244
  %v250 = vtanh.pop %v245
  %v251 = vtanh.pop %v246
  %v252 = vtanh.pop %v247
  %v253 = vadd.f32 %v248, 1.0
  %v254 = vadd.f32 %v249, 1.0
  %v255 = vadd.f32 %v250, 1.0
  %v256 = vadd.f32 %v251, 1.0
  %v257 = vadd.f32 %v252, 1.0
  %v258 = vmul.f32 %v253, 0.5
  %v259 = vmul.f32 %v254, 0.5
  %v260 = vmul.f32 %v255, 0.5
  %v261 = vmul.f32 %v256, 0.5
  %v262 = vmul.f32 %v257, 0.5
  %v263 = vmul.f32 %v210, %v258
  %v264 = vmul.f32 %v212, %v259
  %v265 = vmul.f32 %v215, %v260
  %v266 = vmul.f32 %v217, %v261
  %v267 = vmul.f32 %v220, %v262
  %v268 = vpack.c.bf16 %v263, %v263
  %v269 = vpack.c.bf16 %v264, %v264
  %v270 = vpack.c.bf16 %v265, %v265
  %v271 = vpack.c.bf16 %v266, %v266
  %v272 = vpack.c.bf16 %v267, %v267
  %273 = vst [vmem:[%s5] sm:$0xf] %v268
  %274 = vst [vmem:[%s5 + $0x4] sm:$0xf] %v269
  %275 = vst [vmem:[%s5 + $0x8] sm:$0xf] %v270
  %276 = vst [vmem:[%s5 + $0xc] sm:$0xf] %v271
  %277 = vst [vmem:[%s5 + $0x10] sm:$0x1] %v272
  // Predicated region
  $region22: #{vit_forward.13} parent=0 // pred_check
    _
  $region23: #{vit_forward.13} parent=0 // pred_check_branch
    %279 = sbr.rel (0) target = $region25
  $region24: #{vit_forward.13} parent=0 // pred_region
    _
  $region25: #{vit_forward.13} parent=0 // pred_fallthru
    _
  // Predicated region
  $region26: #{vit_forward.13} parent=0 // pred_check
    _
  $region27: #{vit_forward.13} parent=0 // pred_check_branch
    %281 = sbr.rel (0) target = $region29
  $region28: #{vit_forward.13} parent=0 // pred_region
    _
  $region29: #{vit_forward.13} parent=0 // pred_fallthru
    _

// kernel: vit_forward.14
$region0: #{vit_forward.14}
  #allocation0 [shape = 'u32[]', space=smem, size = 0x4, offset = 0x4, fixed_abs, tag = 'smem constant byte address 0x4 - core index']
  #allocation1 [shape = 'u32[72,128]{1,0:T(1,128)}', space=vmem, size = 0x9000, scoped, tag = 'internal scratch']
  %s0 = inlined_call_operand.vmem [shape: bf16[34,128], index: 0, kind: input, shape index: {}]
  %s1 = inlined_call_operand.vmem [shape: bf16[128,32], index: 1, kind: input, shape index: {}]
  %s2 = inlined_call_operand.vmem [shape: f32[1,32], index: 2, kind: input, shape index: {}]
  %s3 = inlined_call_operand.vmem [shape: bf16[34,32], index: 3, kind: input, shape index: {}]
  %s4 = inlined_call_operand.vmem [shape: bf16[34,32], index: 4, kind: output, shape index: {}]
  %s5 = sld [smem:[#allocation0]]
  $region26: #{vit_forward.14} parent=0
    _
  %s7 = ssub.s32 1, %s5
  %s8 = scalar_select 0, %s7, %s5
  // Predicated region
  $region2: #{vit_forward.14} parent=0 // pred_check
    _
  $region3: #{vit_forward.14} parent=0 // pred_check_branch
    %10 = sbr.rel (0) target = $region5
  $region4: #{vit_forward.14} parent=0 // pred_region
    _
  $region5: #{vit_forward.14} parent=0 // pred_fallthru
    _
  // Predicated region
  $region6: #{vit_forward.14} parent=0 // pred_check
    _
  $region7: #{vit_forward.14} parent=0 // pred_check_branch
    %12 = sbr.rel (0) target = $region9
  $region8: #{vit_forward.14} parent=0 // pred_region
    _
  $region9: #{vit_forward.14} parent=0 // pred_fallthru
    _
  // Predicated region
  $region10: #{vit_forward.14} parent=0 // pred_check
    _
  $region11: #{vit_forward.14} parent=0 // pred_check_branch
    %14 = sbr.rel (0) target = $region13
  $region12: #{vit_forward.14} parent=0 // pred_region
    _
  $region13: #{vit_forward.14} parent=0 // pred_fallthru
    _
  // Predicated region
  $region14: #{vit_forward.14} parent=0 // pred_check
    _
  $region15: #{vit_forward.14} parent=0 // pred_check_branch
    %16 = sbr.rel (0) target = $region17
  $region16: #{vit_forward.14} parent=0 // pred_region
    _
  $region17: #{vit_forward.14} parent=0 // pred_fallthru
    _
  %v17 = vld [vmem:[%s0] sm:$0xf]
  %v18 = vld [vmem:[%s0 + $0x4] sm:$0xf]
  %v19 = vld [vmem:[%s0 + $0x8] sm:$0xf]
  %v20 = vld [vmem:[%s0 + $0xc] sm:$0xf]
  %v21 = vld [vmem:[%s0 + $0x10] sm:$0x1]
  %v22 = vld [vmem:[%s1] sm:$0xf]
  %v23 = vld [vmem:[%s1 + $0x4] sm:$0xf]
  %v24 = vld [vmem:[%s1 + $0x8] sm:$0xf]
  %v25 = vld [vmem:[%s1 + $0xc] sm:$0xf]
  %v26 = vld [vmem:[%s1 + $0x10] sm:$0xf]
  %v27 = vld [vmem:[%s1 + $0x14] sm:$0xf]
  %v28 = vld [vmem:[%s1 + $0x18] sm:$0xf]
  %v29 = vld [vmem:[%s1 + $0x1c] sm:$0xf]
  %v30 = vld [vmem:[%s1 + $0x20] sm:$0xf]
  %v31 = vld [vmem:[%s1 + $0x24] sm:$0xf]
  %v32 = vld [vmem:[%s1 + $0x28] sm:$0xf]
  %v33 = vld [vmem:[%s1 + $0x2c] sm:$0xf]
  %v34 = vld [vmem:[%s1 + $0x30] sm:$0xf]
  %v35 = vld [vmem:[%s1 + $0x34] sm:$0xf]
  %v36 = vld [vmem:[%s1 + $0x38] sm:$0xf]
  %v37 = vld [vmem:[%s1 + $0x3c] sm:$0xf]
  %v38 = vld [vmem:[%s2] sm:$0x1]
  %v40 = vperm.slane %v38, 0
  %v47 = vunpack.c.l.b16 %v17
  %v48 = vunpack.c.l.b16 %v18
  %v49 = vunpack.c.l.b16 %v19
  %v50 = vunpack.c.l.b16 %v20
  %v51 = vunpack.c.l.b16 %v21
  %v52 = vpack.c.b16 %v48, %v47
  %v53 = vpack.c.b16 %v50, %v49
  %v54 = vpack.c.b16 %v51, %v51
  %v74 = vunpack.c.l.b16 %v22
  %v75 = vunpack.c.l.b16 %v23
  %v76 = vunpack.c.l.b16 %v24
  %v77 = vunpack.c.l.b16 %v25
  %v78 = vunpack.c.l.b16 %v26
  %v79 = vunpack.c.l.b16 %v27
  %v80 = vunpack.c.l.b16 %v28
  %v81 = vunpack.c.l.b16 %v29
  %v82 = vunpack.c.l.b16 %v30
  %v83 = vunpack.c.l.b16 %v31
  %v84 = vunpack.c.l.b16 %v32
  %v85 = vunpack.c.l.b16 %v33
  %v86 = vunpack.c.l.b16 %v34
  %v87 = vunpack.c.l.b16 %v35
  %v88 = vunpack.c.l.b16 %v36
  %v89 = vunpack.c.l.b16 %v37
  %v90 = vpack.c.b16 %v75, %v74
  %v91 = vpack.c.b16 %v77, %v76
  %v92 = vpack.c.b16 %v79, %v78
  %v93 = vpack.c.b16 %v81, %v80
  %v94 = vpack.c.b16 %v83, %v82
  %v95 = vpack.c.b16 %v85, %v84
  %v96 = vpack.c.b16 %v87, %v86
  %v97 = vpack.c.b16 %v89, %v88
  %106 = vmatpush.bf16.msra.mxu0 %v97
  %107 = vmatpush.bf16.msra.mxu0 %v96
  %108 = vmatpush.bf16.msra.mxu0 %v95
  %109 = vmatpush.bf16.msra.mxu0 %v94
  %110 = vmatpush.bf16.msra.mxu0 %v93
  %111 = vmatpush.bf16.msra.mxu0 %v92
  %112 = vmatpush.bf16.msra.mxu0 %v91
  %113 = vmatpush.bf16.msra.mxu0 %v90
  %114 = vmatmul.bf16.gmra.mxu0 %v52
  %v115 = vpop.f32.mrf.mxu0
  %v116 = vadd.f32 %v40, %v115
  %v117 = vpop.f32.mrf.mxu0
  %v118 = vadd.f32 %v40, %v117
  %119 = vmatmul.bf16.gmra.mxu0 %v53
  %v120 = vpop.f32.mrf.mxu0
  %v121 = vadd.f32 %v40, %v120
  %v122 = vpop.f32.mrf.mxu0
  %v123 = vadd.f32 %v40, %v122
  %124 = vmatmul.bf16.gmra.mxu0 %v54
  %v125 = vpop.f32.mrf.mxu0
  %v126 = vadd.f32 %v40, %v125
  %v127 = vpop.f32.mrf.mxu0
  %128 = vdwg.mxu0
  %v129 = vld [vmem:[%s3] sm:$0xf]
  %v130 = vld [vmem:[%s3 + $0x4] sm:$0xf]
  %v131 = vld [vmem:[%s3 + $0x8] sm:$0xf]
  %v132 = vld [vmem:[%s3 + $0xc] sm:$0xf]
  %v133 = vld [vmem:[%s3 + $0x10] sm:$0x1]
  %v134 = vunpack.c.l.bf16 %v129
  %v135 = vunpack.c.l.bf16 %v130
  %v136 = vunpack.c.l.bf16 %v131
  %v137 = vunpack.c.l.bf16 %v132
  %v138 = vunpack.c.l.bf16 %v133
  %v139 = vadd.f32 %v116, %v134
  %v140 = vadd.f32 %v118, %v135
  %v141 = vadd.f32 %v121, %v136
  %v142 = vadd.f32 %v123, %v137
  %v143 = vadd.f32 %v126, %v138
  %v144 = vpack.c.bf16 %v139, %v139
  %v145 = vpack.c.bf16 %v140, %v140
  %v146 = vpack.c.bf16 %v141, %v141
  %v147 = vpack.c.bf16 %v142, %v142
  %v148 = vpack.c.bf16 %v143, %v143
  %vm149 = vcmask 257024
  %150 = vst.msk [vmem:[%s4] sm:$0xf] %vm149, %v144
  %151 = vst.msk [vmem:[%s4 + $0x4] sm:$0xf] %vm149, %v145
  %152 = vst.msk [vmem:[%s4 + $0x8] sm:$0xf] %vm149, %v146
  %153 = vst.msk [vmem:[%s4 + $0xc] sm:$0xf] %vm149, %v147
  %vm154 = vcmask 253952
  %155 = vst.msk [vmem:[%s4 + $0x10] sm:$0x1] %vm154, %v148
  // Predicated region
  $region18: #{vit_forward.14} parent=0 // pred_check
    _
  $region19: #{vit_forward.14} parent=0 // pred_check_branch
    %157 = sbr.rel (0) target = $region21
  $region20: #{vit_forward.14} parent=0 // pred_region
    _
  $region21: #{vit_forward.14} parent=0 // pred_fallthru
    _
  // Predicated region
  $region22: #{vit_forward.14} parent=0 // pred_check
    _
  $region23: #{vit_forward.14} parent=0 // pred_check_branch
    %159 = sbr.rel (0) target = $region25
  $region24: #{vit_forward.14} parent=0 // pred_region
    _
  $region25: #{vit_forward.14} parent=0 // pred_fallthru
    _

// kernel: vit_forward.19
$region0: #{vit_forward.19}
  #allocation0 [shape = 'u32[]', space=smem, size = 0x4, offset = 0x4, fixed_abs, tag = 'smem constant byte address 0x4 - core index']
  #allocation1 [shape = 'u32[72,128]{1,0:T(1,128)}', space=vmem, size = 0x9000, scoped, tag = 'internal scratch']
  %s0 = inlined_call_operand.vmem [shape: bf16[2,32], index: 0, kind: input, shape index: {}]
  %s1 = inlined_call_operand.vmem [shape: bf16[32,10], index: 1, kind: input, shape index: {}]
  %s2 = inlined_call_operand.vmem [shape: f32[1,10], index: 2, kind: input, shape index: {}]
  %s3 = inlined_call_operand.hbm [shape: f32[2,10], index: 3, kind: output, shape index: {}]
  %s4 = sld [smem:[#allocation0]]
  $region22: #{vit_forward.19} parent=0
    _
  %s6 = ssub.s32 1, %s4
  %s7 = scalar_select 0, %s6, %s4
  $region1: #{vit_forward.19} parent=0
    #allocation2 [shape = 'u8[1024]{0}', space=vmem, size = 0x400, scoped, tag = 'output window, operand 0, single buffered']
    #allocation3 [shape = 's32[1]{0}', space=sflag, size = 0x4, scoped, tag = 'scoped memory for vit_forward.19']
    %8 = vsyncpa [#allocation3], 0
    // Predicated region
    $region2: #{vit_forward.19} parent=1 // pred_check
      _
    $region3: #{vit_forward.19} parent=1 // pred_check_branch
      %10 = sbr.rel (0) target = $region5
    $region4: #{vit_forward.19} parent=1 // pred_region
      _
    $region5: #{vit_forward.19} parent=1 // pred_fallthru
      _
    // Predicated region
    $region6: #{vit_forward.19} parent=1 // pred_check
      _
    $region7: #{vit_forward.19} parent=1 // pred_check_branch
      %12 = sbr.rel (0) target = $region9
    $region8: #{vit_forward.19} parent=1 // pred_region
      _
    $region9: #{vit_forward.19} parent=1 // pred_fallthru
      _
    // Predicated region
    $region10: #{vit_forward.19} parent=1 // pred_check
      _
    $region11: #{vit_forward.19} parent=1 // pred_check_branch
      %14 = sbr.rel (0) target = $region13
    $region12: #{vit_forward.19} parent=1 // pred_region
      _
    $region13: #{vit_forward.19} parent=1 // pred_fallthru
      _
    %v16 = vld [vmem:[%s0] sm:$0x1]
    %v17 = vld [vmem:[%s1] sm:$0xf]
    %v18 = vld [vmem:[%s1 + $0x4] sm:$0xf]
    %v19 = vld [vmem:[%s1 + $0x8] sm:$0xf]
    %v20 = vld [vmem:[%s1 + $0xc] sm:$0xf]
    %v21 = vld [vmem:[%s2] sm:$0x1]
    %v23 = vperm.slane %v21, 0
    %v29 = vunpack.c.l.b16 %v17
    %v30 = vunpack.c.l.b16 %v18
    %v31 = vunpack.c.l.b16 %v19
    %v32 = vunpack.c.l.b16 %v20
    %v33 = vpack.c.b16 %v30, %v29
    %v34 = vpack.c.b16 %v32, %v31
    %vm37 = vcmask 261120
    %v39 = vsel %vm37, %v16, 0
    %41 = vmatpush.bf16.msra.mxu0 0
    %42 = vmatpush.bf16.msra.mxu0 0
    %43 = vmatpush.bf16.msra.mxu0 0
    %44 = vmatpush.bf16.msra.mxu0 0
    %45 = vmatpush.bf16.msra.mxu0 0
    %46 = vmatpush.bf16.msra.mxu0 0
    %47 = vmatpush.bf16.msra.mxu0 %v34
    %48 = vmatpush.bf16.msra.mxu0 %v33
    %49 = vmatmul.bf16.gmra.mxu0 %v39
    %v50 = vpop.f32.mrf.mxu0
    %v51 = vadd.f32 %v23, %v50
    %v52 = vpop.f32.mrf.mxu0
    %53 = vdwg.mxu0
    %vm54 = vcmask 74752
    %v55 = vsel %vm54, %v51, -inf
    %56 = vmax.xlane.f32.xlu0 %v55
    %v57 = vpop.xlane.xlu0 %56
    %v58 = vsub.f32 %v51, %v57
    %v59 = vmul.f32 %v58, 1.442695
    %v60 = vpow.pop %v59
    %v61 = vsel %vm54, %v60, 0.0
    %62 = vadd.xlane.f32.xlu0 %v61
    %v63 = vpop.xlane.xlu0 %62
    %v64 = vrcp.pop %v63
    %v65 = vmul.f32 %v63, %v64
    %v66 = vsub.f32 1.0, %v65
    %v67 = vmul.f32 %v64, %v66
    %v68 = vadd.f32 %v64, %v67
    %vm69 = vweird.f32 %v63
    %vm70 = vweird.f32 %v64
    %vm71 = vmor %vm69, %vm70
    %v72 = vsel %vm71, %v64, %v68
    %v73 = vand.u32 2147483647, %v63
    %vm74 = vcmp.eq.f32.partialorder %v73, 8.507059e+37
    %v75 = vand.u32 %v63, 2147483648
    %v76 = vor.u32 1.1754944e-38, %v75
    %v77 = vsel %vm74, %v76, %v72
    %v78 = vmul.f32 %v60, %v77
    %79 = vst.msk [vmem:[#allocation2] sm:$0x3] %vm54, %v78
    // Predicated region
    $region14: #{vit_forward.19} parent=1 // pred_check
      _
    $region15: #{vit_forward.19} parent=1 // pred_check_branch
      %81 = sbr.rel (0) target = $region17
    $region16: #{vit_forward.19} parent=1 // pred_region
      %83 = vsyncadd [#allocation3], 0
      %s85 = sshll.u32 [#allocation2], 4
      %s86 = int_to_ptr.vmem [resolvable:$true] %s85
      %s87 = sshll.u32 %s3, 4
      %s88 = int_to_ptr.hbm [resolvable:$true] %s87
      %90 = dma.vmem_to_hbm [thread:$0]  %s86, 32, %s88, [#allocation3]
    $region17: #{vit_forward.19} parent=1 // pred_fallthru
      _
    // Predicated region
    $region18: #{vit_forward.19} parent=1 // pred_check
      _
    $region19: #{vit_forward.19} parent=1 // pred_check_branch
      %92 = sbr.rel (0) target = $region21
    $region20: #{vit_forward.19} parent=1 // pred_region
      %94 = dma.done [#allocation3], 32
    $region21: #{vit_forward.19} parent=1 // pred_fallthru
      _
    %95 = vsyncpa [#allocation3], 1

</llo_original>
